<compile_context>
chip_gen: v7x
topology: tpu7x:2x2x1
jax: 0.10.0
libtpu: 0.0.40
codegen_flags: <defaults>
</compile_context>

<pallas_src>
import numpy as np
import jax
import jax.numpy as jnp
from jax import lax
from jax.experimental import pallas as pl
from jax.experimental.pallas import tpu as pltpu

# ----------------------------- static config (mirrors KNRM.__init__) -----------------------------
KERNEL_NUM = 21
SIGMA = 0.1
EXACT_SIGMA = 0.001
OUT_LAYERS = [10, 5]
LANE = 128


def _get_kernels_mu(k):
    # identical to KNRM._get_kernels_layers._get_kernels_mu
    step = 1.0 / (k - 1)
    left = -1 + step
    right = 1 - step
    return np.hstack([np.arange(left, right, (right - left) / (k - 2)), right, 1.0])


MUS = _get_kernels_mu(KERNEL_NUM)                      # static, not learned (21 values)
SIGMAS = np.where(MUS != 1.0, SIGMA, EXACT_SIGMA)      # exact-match kernel gets exact_sigma
NUM_KERNELS = len(MUS)                                 # == 21


def _round_up(x, m):
    return ((x + m - 1) // m) * m


# ----------------------------- Pallas kernel -----------------------------
def knrm_kernel(q_ref, d_ref, w1_ref, b1_ref, w2_ref, b2_ref, w3_ref, b3_ref, out_ref):
    """One batch tile: cosine matching -> 21 Gaussian kernels -> log1p pooling -> MLP."""
    alpha = 1e-06
    q = q_ref[...]                                           # [TB, LQ, D] f32
    d = d_ref[...]                                           # [TB, LD, D] f32

    # Row-normalize once (O(TB*L*D)) instead of dividing the [TB,LQ,LD] matrix by an
    # outer product of norms; matches torch CosineSimilarity(eps=1e-6) semantics.
    q = q * lax.rsqrt(jnp.sum(q * q, axis=2, keepdims=True) + alpha)
    d = d * lax.rsqrt(jnp.sum(d * d, axis=2, keepdims=True) + alpha)

    # Cosine matching matrix [TB, LQ, LD].  f32 operands -> Mosaic emits a native f32 MXU
    # matmul (no bf16 quantization); the exact-match Gaussian (sigma=0.001) relies on
    # this, and the pure-JAX reference pins Precision.HIGHEST to match.
    matrix = jnp.einsum('bqd,bkd->bqk', q, d, preferred_element_type=jnp.float32)

    def pool(g):
        # sum over document axis (lanes), log1p, sum over query axis -> [TB, 1]
        return jnp.sum(jnp.log1p(jnp.sum(g, axis=-1)), axis=-1, keepdims=True)

    # ---- 20 soft Gaussian kernels (shared sigma=0.1, mus on a uniform ~0.1 grid) ------
    # Anchored factorization: g(mu_a + d) = a * T^(10 d) * exp(-2 s d mu_a - s d^2)
    # with a = exp(-s (x - mu_a)^2), s = 1/(2 sigma^2) ~= 50, T = exp(2 s step x).
    # One anchor exp per group of 5 kernels + exp(+-10x) => 4 + 2 exps for all 20.
    s = 1.0 / (2.0 * SIGMA * SIGMA)                          # ~50.0 (static python float)
    soft_mus = [float(m) for m in MUS[:-1]]                  # 20 soft mus
    step = soft_mus[1] - soft_mus[0]                         # ~0.1
    t = jnp.exp((2.0 * s * step) * matrix)                   # exp(+10x)  in [e^-10, e^10]
    tinv = jnp.exp((-2.0 * s * step) * matrix)               # exp(-10x)
    pw = {1: t, 2: t * t, -1: tinv, -2: tinv * tinv}         # |j|<=2 -> bounded by e^20

    pooled = []
    group = 5
    for g0 in range(0, len(soft_mus), group):
        a_idx = g0 + group // 2
        mu_a = soft_mus[a_idx]
        anchor = jnp.exp((-s) * jnp.square(matrix - mu_a))   # 1 exp per group of 5
        for k in range(g0, g0 + group):
            if k == a_idx:
                g = anchor
            else:
                delta = soft_mus[k] - mu_a
                j = int(round(delta / step))                 # in {-2,-1,1,2}
                c = float(np.exp(-2.0 * s * delta * mu_a - s * delta * delta))
                g = (anchor * pw[j]) * c
            pooled.append(pool(g))

    # ---- exact-match kernel (mu=1, sigma=0.001): too sharp to factor, direct exp ------
    exact_scale = -1.0 / (2.0 * EXACT_SIGMA * EXACT_SIGMA)
    pooled.append(pool(jnp.exp(jnp.square(matrix - 1.0) * exact_scale)))

    ko = jnp.concatenate(pooled, axis=1)                     # [TB, 21], MUS order

    # MLP: Sequential(ReLU, Linear(21,10), ReLU, Linear(10,5), ReLU, Linear(5,1)).
    # Weights pre-transposed in the wrapper (plain x @ W, no in-kernel .T).
    x = jnp.maximum(ko, 0.0)
    x = jnp.maximum(jnp.dot(x, w1_ref[...], preferred_element_type=jnp.float32) + b1_ref[...], 0.0)
    x = jnp.maximum(jnp.dot(x, w2_ref[...], preferred_element_type=jnp.float32) + b2_ref[...], 0.0)
    logits = jnp.dot(x, w3_ref[...], preferred_element_type=jnp.float32) + b3_ref[...]   # [TB, 1]

    # Lane-dense (TB, 128) store (unmasked vst); wrapper slices column 0.
    out_ref[...] = jnp.broadcast_to(logits, out_ref.shape)


# ----------------------------- tiling helpers -----------------------------
def _vmem_capacity_bytes():
    try:
        return int(pltpu.get_tpu_info().vmem_capacity_bytes)
    except Exception:
        return 64 * 2**20            # conservative fallback (v7x per-TensorCore VMEM)


def _per_row_bytes(lq, ld, d):
    """Per-batch-row VMEM footprint with (8,128) layout padding."""
    lq_s = _round_up(max(lq, 1), 8)
    ld_s = _round_up(max(ld, 1), 8)
    d_l = _round_up(max(d, 1), 128)
    ld_l = _round_up(max(ld, 1), 128)
    in_bytes = (lq_s + ld_s) * d_l * 4                 # q + d input block, single buffer
    tmp_bytes = 12 * lq_s * ld_l * 4                   # live matrix-sized f32 temporaries
    return in_bytes, tmp_bytes


def _choose_batch_tile(b2, lq, ld, d, budget_bytes):
    """Largest batch tile that fits the budget, with >=2 grid steps for megacore."""
    if b2 <= 8:
        return int(b2)                                 # tiny batch: single full block
    in_b, tmp_b = _per_row_bytes(lq, ld, d)
    per_row = 2 * in_b + tmp_b                         # double-buffered inputs + temps
    tb = int(budget_bytes // max(per_row, 1))
    tb = min(tb, 128, b2)
    # keep >=2 (prefer 4) grid steps so the "parallel" batch axis can shard across
    # v7x's two TensorCores (harmless on single-core v5e/v6e).
    tb = min(tb, _round_up(pl.cdiv(b2, 4), 8))
    tb = max(8, (tb // 8) * 8)                         # keep (TB,128) output block legal
    return int(tb)


def _vmem_limit_bytes(tb, lq, ld, d, cap_bytes):
    in_b, tmp_b = _per_row_bytes(lq, ld, d)
    need = tb * (2 * in_b + tmp_b)
    need += 2 * tb * LANE * 4                          # double-buffered output block
    need += 2 << 20                                    # weights + Mosaic scratch headroom
    lo = 16 * 2**20
    hi = max(lo, min(int(cap_bytes * 9 // 16), 64 * 2**20))   # v7x ~36 MiB, v5e/v6e 64 MiB
    return int(min(max(need, lo), hi))


# ----------------------------- wrapper -----------------------------
def knrm_forward(emb_matrix, input_1, input_2, mlp_params):
    """emb_matrix: [V, D] f32; input_i: dict with 'query' [B,Lq] int32, 'document' [B,Ld] int32."""
    B = input_1['query'].shape[0]

    # Stack the two pairwise inputs along batch BEFORE the embedding gather so the
    # matching/pooling/MLP hot path runs once over [2B, ...] (no in-kernel concat).
    q_ids = jnp.concatenate([jnp.asarray(input_1['query']), jnp.asarray(input_2['query'])], axis=0)
    d_ids = jnp.concatenate([jnp.asarray(input_1['document']), jnp.asarray(input_2['document'])], axis=0)

    # TODO(synk): fuse this gather into the kernel (scalar-prefetched ids + per-row DMA)
    # to avoid the HBM round trip of the [2B, L, D] activations.
    qe = emb_matrix[q_ids]                             # [2B, LQ, D]
    de = emb_matrix[d_ids]                             # [2B, LD, D]

    w1, b1, w2, b2, w3, b3 = mlp_params
    w1t, w2t, w3t = w1.T, w2.T, w3.T                   # pre-transpose for plain x @ W

    B2, LQ, D = qe.shape
    LD = de.shape[1]

    cap = _vmem_capacity_bytes()
    tile_budget = min(cap * 3 // 8, 48 * 2**20)        # v7x ~24 MiB, v5e/v6e 48 MiB
    TB = _choose_batch_tile(B2, LQ, LD, D, tile_budget)
    B2_PAD = _round_up(B2, TB)
    grid = (B2_PAD // TB,)

    if B2_PAD != B2:                                   # padded rows are zero -> finite junk, sliced off
        qe = jnp.pad(qe, ((0, B2_PAD - B2), (0, 0), (0, 0)))
        de = jnp.pad(de, ((0, B2_PAD - B2), (0, 0), (0, 0)))

    q_spec = pl.BlockSpec((TB, LQ, D), lambda b: (b, 0, 0))
    d_spec = pl.BlockSpec((TB, LD, D), lambda b: (b, 0, 0))
    w_spec = lambda a: pl.BlockSpec(a.shape, lambda b: (0, 0))       # resident weights
    out_spec = pl.BlockSpec((TB, LANE), lambda b: (b, 0))

    logits = pl.pallas_call(
        knrm_kernel,
        out_shape=jax.ShapeDtypeStruct((B2_PAD, LANE), jnp.float32),
        grid=grid,
        in_specs=[q_spec, d_spec,
                  w_spec(w1t), w_spec(b1), w_spec(w2t), w_spec(b2), w_spec(w3t), w_spec(b3)],
        out_specs=out_spec,
        compiler_params=pltpu.CompilerParams(
            dimension_semantics=("parallel",),
            vmem_limit_bytes=_vmem_limit_bytes(TB, LQ, LD, D, cap)),
    )(qe, de, w1t, b1, w2t, b2, w3t, b3)

    l1 = logits[:B, :1]                                # input_1 logits
    l2 = logits[B:2 * B, :1]                           # input_2 logits
    return 1.0 / (1.0 + jnp.exp(-(l1 - l2)))           # torch.nn.Sigmoid(l1 - l2), (B, 1)


# ----------------------------- deterministic parameter init (replaces torch.load) -----------------
def make_params(key, vocab, emb_dim):
    ks = jax.random.split(key, 8)
    emb = jax.random.normal(ks[0], (vocab, emb_dim), jnp.float32) * 0.5
    emb = emb.at[0].set(0.0)  # padding_idx=0 row

    def linear(k, fan_in, fan_out):
        kw, kb = jax.random.split(k)
        bound = 1.0 / np.sqrt(fan_in)
        w = jax.random.uniform(kw, (fan_out, fan_in), jnp.float32, -bound, bound)  # torch layout
        b = jax.random.uniform(kb, (1, fan_out), jnp.float32, -bound, bound)
        return w, b

    w1, b1 = linear(ks[1], NUM_KERNELS, OUT_LAYERS[0])
    w2, b2 = linear(ks[2], OUT_LAYERS[0], OUT_LAYERS[1])
    w3, b3 = linear(ks[3], OUT_LAYERS[1], 1)
    return emb, (w1, b1, w2, b2, w3, b3)


# ----------------------------- pure-JAX reference for validation -----------------------------
def _ref_matching_matrix(q, d):
    alpha = 1e-06
    nom = jnp.einsum('bqd,bkd->bqk', q, d, preferred_element_type=jnp.float32,
                     precision=lax.Precision.HIGHEST)
    qn = jnp.sqrt(jnp.sum(q * q, axis=2) + alpha)
    dn = jnp.sqrt(jnp.sum(d * d, axis=2) + alpha)
    return nom / (qn[:, :, None] * dn[:, None, :])


def _ref_apply_kernels(matrix):
    km = []
    for mu, sig in zip(MUS.tolist(), SIGMAS.tolist()):
        g = jnp.exp(-jnp.square(matrix - mu) / (2.0 * sig * sig))
        k = jnp.sum(jnp.log1p(jnp.sum(g, axis=-1)), axis=-1, keepdims=True)
        km.append(k)
    return jnp.concatenate(km, axis=1)


def _ref_mlp(x, w1, b1, w2, b2, w3, b3):
    hp = lax.Precision.HIGHEST
    x = jnp.maximum(x, 0.0)
    x = jnp.maximum(jnp.dot(x, w1.T, precision=hp) + b1, 0.0)
    x = jnp.maximum(jnp.dot(x, w2.T, precision=hp) + b2, 0.0)
    return jnp.dot(x, w3.T, precision=hp) + b3


def knrm_reference(emb_matrix, input_1, input_2, mlp_params):
    w1, b1, w2, b2, w3, b3 = mlp_params

    def predict(inp):
        qe = emb_matrix[inp['query']]
        de = emb_matrix[inp['document']]
        m = _ref_matching_matrix(qe, de)
        ko = _ref_apply_kernels(m)
        return _ref_mlp(ko, w1, b1, w2, b2, w3, b3)

    l1 = predict(input_1)
    l2 = predict(input_2)
    return 1.0 / (1.0 + jnp.exp(-(l1 - l2)))


if __name__ == "__main__":
    B, LQ, LD, D, VOCAB = 2, 8, 16, 32, 50

    key = jax.random.PRNGKey(0)
    kp, k1, k2, k3, k4 = jax.random.split(key, 5)
    emb_matrix, mlp_params = make_params(kp, VOCAB, D)

    input_1 = {
        'query': jax.random.randint(k1, (B, LQ), 0, VOCAB, dtype=jnp.int32),
        'document': jax.random.randint(k2, (B, LD), 0, VOCAB, dtype=jnp.int32),
    }
    input_2 = {
        'query': jax.random.randint(k3, (B, LQ), 0, VOCAB, dtype=jnp.int32),
        'document': jax.random.randint(k4, (B, LD), 0, VOCAB, dtype=jnp.int32),
    }

    out = knrm_forward(emb_matrix, input_1, input_2, mlp_params)
    out = jax.block_until_ready(out)

    ref = knrm_reference(emb_matrix, input_1, input_2, mlp_params)
    assert out.shape == (B, 1) and out.dtype == jnp.float32
    np.testing.assert_allclose(np.asarray(out), np.asarray(ref), atol=2e-4, rtol=2e-4)

    print("KERNEL_OK")
</pallas_src>

<mosaic_0001>
module attributes {stable_mosaic.version = 11 : i64} {
  func.func @knrm_kernel(%arg0: i32, %arg1: memref<4x8x32xf32, #tpu.memory_space<vmem>>, %arg2: memref<4x16x32xf32, #tpu.memory_space<vmem>>, %arg3: memref<21x10xf32, #tpu.memory_space<vmem>>, %arg4: memref<1x10xf32, #tpu.memory_space<vmem>>, %arg5: memref<10x5xf32, #tpu.memory_space<vmem>>, %arg6: memref<1x5xf32, #tpu.memory_space<vmem>>, %arg7: memref<5x1xf32, #tpu.memory_space<vmem>>, %arg8: memref<1x1xf32, #tpu.memory_space<vmem>>, %arg9: memref<4x128xf32, #tpu.memory_space<vmem>>) attributes {dimension_semantics = [#tpu.dimension_semantics<parallel>], iteration_bounds = array<i64: 1>, scalar_prefetch = 0 : i64, scratch_operands = 0 : i64, tpu.core_type = #tpu.core_type<tc>, window_params = [{transform_indices = @transform_0, window_bounds = array<i64: 4, 8, 32>}, {transform_indices = @transform_1, window_bounds = array<i64: 4, 16, 32>}, {pipeline_mode = #tpu.pipeline_mode<synchronous>, transform_indices = @transform_2, window_bounds = array<i64: 21, 10>}, {pipeline_mode = #tpu.pipeline_mode<synchronous>, transform_indices = @transform_3, window_bounds = array<i64: 1, 10>}, {pipeline_mode = #tpu.pipeline_mode<synchronous>, transform_indices = @transform_4, window_bounds = array<i64: 10, 5>}, {pipeline_mode = #tpu.pipeline_mode<synchronous>, transform_indices = @transform_5, window_bounds = array<i64: 1, 5>}, {pipeline_mode = #tpu.pipeline_mode<synchronous>, transform_indices = @transform_6, window_bounds = array<i64: 5, 1>}, {pipeline_mode = #tpu.pipeline_mode<synchronous>, transform_indices = @transform_7, window_bounds = array<i64: 1, 1>}, {transform_indices = @transform_8, window_bounds = array<i64: 4, 128>}]} {
    %c0 = arith.constant 0 : index
    %c0_0 = arith.constant 0 : index
    %c0_1 = arith.constant 0 : index
    %0 = vector.load %arg1[%c0, %c0_0, %c0_1] : memref<4x8x32xf32, #tpu.memory_space<vmem>>, vector<4x8x32xf32>
    %c0_2 = arith.constant 0 : index
    %c0_3 = arith.constant 0 : index
    %c0_4 = arith.constant 0 : index
    %1 = vector.load %arg2[%c0_2, %c0_3, %c0_4] : memref<4x16x32xf32, #tpu.memory_space<vmem>>, vector<4x16x32xf32>
    %2 = arith.mulf %0, %0 : vector<4x8x32xf32>
    %cst = arith.constant dense<0.000000e+00> : vector<4x8xf32>
    %3 = vector.multi_reduction <add>, %2, %cst [2] : vector<4x8x32xf32> to vector<4x8xf32>
    %4 = vector.shape_cast %3 : vector<4x8xf32> to vector<4x8x1xf32>
    %cst_5 = arith.constant 9.99999997E-7 : f32
    %5 = vector.broadcast %cst_5 : f32 to vector<4x8x1xf32>
    %6 = arith.addf %4, %5 : vector<4x8x1xf32>
    %7 = math.rsqrt %6 : vector<4x8x1xf32>
    %8 = vector.broadcast %7 : vector<4x8x1xf32> to vector<4x8x32xf32>
    %9 = arith.mulf %0, %8 : vector<4x8x32xf32>
    %10 = arith.mulf %1, %1 : vector<4x16x32xf32>
    %cst_6 = arith.constant dense<0.000000e+00> : vector<4x16xf32>
    %11 = vector.multi_reduction <add>, %10, %cst_6 [2] : vector<4x16x32xf32> to vector<4x16xf32>
    %12 = vector.shape_cast %11 : vector<4x16xf32> to vector<4x16x1xf32>
    %cst_7 = arith.constant 9.99999997E-7 : f32
    %13 = vector.broadcast %cst_7 : f32 to vector<4x16x1xf32>
    %14 = arith.addf %12, %13 : vector<4x16x1xf32>
    %15 = math.rsqrt %14 : vector<4x16x1xf32>
    %16 = vector.broadcast %15 : vector<4x16x1xf32> to vector<4x16x32xf32>
    %17 = arith.mulf %1, %16 : vector<4x16x32xf32>
    "tpu.trace_start"() <{level = 10 : i32, message = "bqd,bkd->bqk"}> : () -> ()
    %cst_8 = arith.constant dense<0.000000e+00> : vector<4x8x16xf32>
    %18 = tpu.matmul %9, %17, %cst_8 {dimension_numbers = #tpu.dot_dimension_numbers<[2], [2], [1], [1], [0, 0, 0, 1, 1, 1], [0], [0]>} : vector<4x8x32xf32>, vector<4x16x32xf32>, vector<4x8x16xf32> -> vector<4x8x16xf32>
    "tpu.trace_stop"() : () -> ()
    %cst_9 = arith.constant 1.000000e+01 : f32
    %19 = vector.broadcast %cst_9 : f32 to vector<4x8x16xf32>
    %20 = arith.mulf %19, %18 : vector<4x8x16xf32>
    %21 = math.exp %20 : vector<4x8x16xf32>
    %cst_10 = arith.constant -1.000000e+01 : f32
    %22 = vector.broadcast %cst_10 : f32 to vector<4x8x16xf32>
    %23 = arith.mulf %22, %18 : vector<4x8x16xf32>
    %24 = math.exp %23 : vector<4x8x16xf32>
    %25 = arith.mulf %21, %21 : vector<4x8x16xf32>
    %26 = arith.mulf %24, %24 : vector<4x8x16xf32>
    %cst_11 = arith.constant -7.500000e-01 : f32
    %27 = vector.broadcast %cst_11 : f32 to vector<4x8x16xf32>
    %28 = arith.subf %18, %27 : vector<4x8x16xf32>
    %29 = arith.mulf %28, %28 : vector<4x8x16xf32>
    %cst_12 = arith.constant -5.000000e+01 : f32
    %30 = vector.broadcast %cst_12 : f32 to vector<4x8x16xf32>
    %31 = arith.mulf %30, %29 : vector<4x8x16xf32>
    %32 = math.exp %31 : vector<4x8x16xf32>
    %33 = arith.mulf %32, %26 : vector<4x8x16xf32>
    %cst_13 = arith.constant 4.13993781E-8 : f32
    %34 = vector.broadcast %cst_13 : f32 to vector<4x8x16xf32>
    %35 = arith.mulf %33, %34 : vector<4x8x16xf32>
    %cst_14 = arith.constant dense<0.000000e+00> : vector<4x8xf32>
    %36 = vector.multi_reduction <add>, %35, %cst_14 [2] : vector<4x8x16xf32> to vector<4x8xf32>
    %37 = math.log1p %36 : vector<4x8xf32>
    %cst_15 = arith.constant dense<0.000000e+00> : vector<4xf32>
    %38 = vector.multi_reduction <add>, %37, %cst_15 [1] : vector<4x8xf32> to vector<4xf32>
    %39 = vector.shape_cast %38 : vector<4xf32> to vector<4x1xf32>
    %40 = arith.mulf %32, %24 : vector<4x8x16xf32>
    %cst_16 = arith.constant 3.35462624E-4 : f32
    %41 = vector.broadcast %cst_16 : f32 to vector<4x8x16xf32>
    %42 = arith.mulf %40, %41 : vector<4x8x16xf32>
    %cst_17 = arith.constant dense<0.000000e+00> : vector<4x8xf32>
    %43 = vector.multi_reduction <add>, %42, %cst_17 [2] : vector<4x8x16xf32> to vector<4x8xf32>
    %44 = math.log1p %43 : vector<4x8xf32>
    %cst_18 = arith.constant dense<0.000000e+00> : vector<4xf32>
    %45 = vector.multi_reduction <add>, %44, %cst_18 [1] : vector<4x8xf32> to vector<4xf32>
    %46 = vector.shape_cast %45 : vector<4xf32> to vector<4x1xf32>
    %cst_19 = arith.constant dense<0.000000e+00> : vector<4x8xf32>
    %47 = vector.multi_reduction <add>, %32, %cst_19 [2] : vector<4x8x16xf32> to vector<4x8xf32>
    %48 = math.log1p %47 : vector<4x8xf32>
    %cst_20 = arith.constant dense<0.000000e+00> : vector<4xf32>
    %49 = vector.multi_reduction <add>, %48, %cst_20 [1] : vector<4x8xf32> to vector<4xf32>
    %50 = vector.shape_cast %49 : vector<4xf32> to vector<4x1xf32>
    %51 = arith.mulf %32, %21 : vector<4x8x16xf32>
    %cst_21 = arith.constant 1096.63318 : f32
    %52 = vector.broadcast %cst_21 : f32 to vector<4x8x16xf32>
    %53 = arith.mulf %51, %52 : vector<4x8x16xf32>
    %cst_22 = arith.constant dense<0.000000e+00> : vector<4x8xf32>
    %54 = vector.multi_reduction <add>, %53, %cst_22 [2] : vector<4x8x16xf32> to vector<4x8xf32>
    %55 = math.log1p %54 : vector<4x8xf32>
    %cst_23 = arith.constant dense<0.000000e+00> : vector<4xf32>
    %56 = vector.multi_reduction <add>, %55, %cst_23 [1] : vector<4x8xf32> to vector<4xf32>
    %57 = vector.shape_cast %56 : vector<4xf32> to vector<4x1xf32>
    %58 = arith.mulf %32, %25 : vector<4x8x16xf32>
    %cst_24 = arith.constant 442413.406 : f32
    %59 = vector.broadcast %cst_24 : f32 to vector<4x8x16xf32>
    %60 = arith.mulf %58, %59 : vector<4x8x16xf32>
    %cst_25 = arith.constant dense<0.000000e+00> : vector<4x8xf32>
    %61 = vector.multi_reduction <add>, %60, %cst_25 [2] : vector<4x8x16xf32> to vector<4x8xf32>
    %62 = math.log1p %61 : vector<4x8xf32>
    %cst_26 = arith.constant dense<0.000000e+00> : vector<4xf32>
    %63 = vector.multi_reduction <add>, %62, %cst_26 [1] : vector<4x8xf32> to vector<4xf32>
    %64 = vector.shape_cast %63 : vector<4xf32> to vector<4x1xf32>
    %cst_27 = arith.constant -2.500000e-01 : f32
    %65 = vector.broadcast %cst_27 : f32 to vector<4x8x16xf32>
    %66 = arith.subf %18, %65 : vector<4x8x16xf32>
    %67 = arith.mulf %66, %66 : vector<4x8x16xf32>
    %cst_28 = arith.constant -5.000000e+01 : f32
    %68 = vector.broadcast %cst_28 : f32 to vector<4x8x16xf32>
    %69 = arith.mulf %68, %67 : vector<4x8x16xf32>
    %70 = math.exp %69 : vector<4x8x16xf32>
    %71 = arith.mulf %70, %26 : vector<4x8x16xf32>
    %cst_29 = arith.constant 9.118820e-04 : f32
    %72 = vector.broadcast %cst_29 : f32 to vector<4x8x16xf32>
    %73 = arith.mulf %71, %72 : vector<4x8x16xf32>
    %cst_30 = arith.constant dense<0.000000e+00> : vector<4x8xf32>
    %74 = vector.multi_reduction <add>, %73, %cst_30 [2] : vector<4x8x16xf32> to vector<4x8xf32>
    %75 = math.log1p %74 : vector<4x8xf32>
    %cst_31 = arith.constant dense<0.000000e+00> : vector<4xf32>
    %76 = vector.multi_reduction <add>, %75, %cst_31 [1] : vector<4x8xf32> to vector<4xf32>
    %77 = vector.shape_cast %76 : vector<4xf32> to vector<4x1xf32>
    %78 = arith.mulf %70, %24 : vector<4x8x16xf32>
    %cst_32 = arith.constant 0.0497870669 : f32
    %79 = vector.broadcast %cst_32 : f32 to vector<4x8x16xf32>
    %80 = arith.mulf %78, %79 : vector<4x8x16xf32>
    %cst_33 = arith.constant dense<0.000000e+00> : vector<4x8xf32>
    %81 = vector.multi_reduction <add>, %80, %cst_33 [2] : vector<4x8x16xf32> to vector<4x8xf32>
    %82 = math.log1p %81 : vector<4x8xf32>
    %cst_34 = arith.constant dense<0.000000e+00> : vector<4xf32>
    %83 = vector.multi_reduction <add>, %82, %cst_34 [1] : vector<4x8xf32> to vector<4xf32>
    %84 = vector.shape_cast %83 : vector<4xf32> to vector<4x1xf32>
    %cst_35 = arith.constant dense<0.000000e+00> : vector<4x8xf32>
    %85 = vector.multi_reduction <add>, %70, %cst_35 [2] : vector<4x8x16xf32> to vector<4x8xf32>
    %86 = math.log1p %85 : vector<4x8xf32>
    %cst_36 = arith.constant dense<0.000000e+00> : vector<4xf32>
    %87 = vector.multi_reduction <add>, %86, %cst_36 [1] : vector<4x8xf32> to vector<4xf32>
    %88 = vector.shape_cast %87 : vector<4xf32> to vector<4x1xf32>
    %89 = arith.mulf %70, %21 : vector<4x8x16xf32>
    %cst_37 = arith.constant 7.3890562 : f32
    %90 = vector.broadcast %cst_37 : f32 to vector<4x8x16xf32>
    %91 = arith.mulf %89, %90 : vector<4x8x16xf32>
    %cst_38 = arith.constant dense<0.000000e+00> : vector<4x8xf32>
    %92 = vector.multi_reduction <add>, %91, %cst_38 [2] : vector<4x8x16xf32> to vector<4x8xf32>
    %93 = math.log1p %92 : vector<4x8xf32>
    %cst_39 = arith.constant dense<0.000000e+00> : vector<4xf32>
    %94 = vector.multi_reduction <add>, %93, %cst_39 [1] : vector<4x8xf32> to vector<4xf32>
    %95 = vector.shape_cast %94 : vector<4xf32> to vector<4x1xf32>
    %96 = arith.mulf %70, %25 : vector<4x8x16xf32>
    %cst_40 = arith.constant 20.085537 : f32
    %97 = vector.broadcast %cst_40 : f32 to vector<4x8x16xf32>
    %98 = arith.mulf %96, %97 : vector<4x8x16xf32>
    %cst_41 = arith.constant dense<0.000000e+00> : vector<4x8xf32>
    %99 = vector.multi_reduction <add>, %98, %cst_41 [2] : vector<4x8x16xf32> to vector<4x8xf32>
    %100 = math.log1p %99 : vector<4x8xf32>
    %cst_42 = arith.constant dense<0.000000e+00> : vector<4xf32>
    %101 = vector.multi_reduction <add>, %100, %cst_42 [1] : vector<4x8xf32> to vector<4xf32>
    %102 = vector.shape_cast %101 : vector<4xf32> to vector<4x1xf32>
    %cst_43 = arith.constant 2.500000e-01 : f32
    %103 = vector.broadcast %cst_43 : f32 to vector<4x8x16xf32>
    %104 = arith.subf %18, %103 : vector<4x8x16xf32>
    %105 = arith.mulf %104, %104 : vector<4x8x16xf32>
    %cst_44 = arith.constant -5.000000e+01 : f32
    %106 = vector.broadcast %cst_44 : f32 to vector<4x8x16xf32>
    %107 = arith.mulf %106, %105 : vector<4x8x16xf32>
    %108 = math.exp %107 : vector<4x8x16xf32>
    %109 = arith.mulf %108, %26 : vector<4x8x16xf32>
    %cst_45 = arith.constant 20.085537 : f32
    %110 = vector.broadcast %cst_45 : f32 to vector<4x8x16xf32>
    %111 = arith.mulf %109, %110 : vector<4x8x16xf32>
    %cst_46 = arith.constant dense<0.000000e+00> : vector<4x8xf32>
    %112 = vector.multi_reduction <add>, %111, %cst_46 [2] : vector<4x8x16xf32> to vector<4x8xf32>
    %113 = math.log1p %112 : vector<4x8xf32>
    %cst_47 = arith.constant dense<0.000000e+00> : vector<4xf32>
    %114 = vector.multi_reduction <add>, %113, %cst_47 [1] : vector<4x8xf32> to vector<4xf32>
    %115 = vector.shape_cast %114 : vector<4xf32> to vector<4x1xf32>
    %116 = arith.mulf %108, %24 : vector<4x8x16xf32>
    %cst_48 = arith.constant 7.3890562 : f32
    %117 = vector.broadcast %cst_48 : f32 to vector<4x8x16xf32>
    %118 = arith.mulf %116, %117 : vector<4x8x16xf32>
    %cst_49 = arith.constant dense<0.000000e+00> : vector<4x8xf32>
    %119 = vector.multi_reduction <add>, %118, %cst_49 [2] : vector<4x8x16xf32> to vector<4x8xf32>
    %120 = math.log1p %119 : vector<4x8xf32>
    %cst_50 = arith.constant dense<0.000000e+00> : vector<4xf32>
    %121 = vector.multi_reduction <add>, %120, %cst_50 [1] : vector<4x8xf32> to vector<4xf32>
    %122 = vector.shape_cast %121 : vector<4xf32> to vector<4x1xf32>
    %cst_51 = arith.constant dense<0.000000e+00> : vector<4x8xf32>
    %123 = vector.multi_reduction <add>, %108, %cst_51 [2] : vector<4x8x16xf32> to vector<4x8xf32>
    %124 = math.log1p %123 : vector<4x8xf32>
    %cst_52 = arith.constant dense<0.000000e+00> : vector<4xf32>
    %125 = vector.multi_reduction <add>, %124, %cst_52 [1] : vector<4x8xf32> to vector<4xf32>
    %126 = vector.shape_cast %125 : vector<4xf32> to vector<4x1xf32>
    %127 = arith.mulf %108, %21 : vector<4x8x16xf32>
    %cst_53 = arith.constant 0.0497870669 : f32
    %128 = vector.broadcast %cst_53 : f32 to vector<4x8x16xf32>
    %129 = arith.mulf %127, %128 : vector<4x8x16xf32>
    %cst_54 = arith.constant dense<0.000000e+00> : vector<4x8xf32>
    %130 = vector.multi_reduction <add>, %129, %cst_54 [2] : vector<4x8x16xf32> to vector<4x8xf32>
    %131 = math.log1p %130 : vector<4x8xf32>
    %cst_55 = arith.constant dense<0.000000e+00> : vector<4xf32>
    %132 = vector.multi_reduction <add>, %131, %cst_55 [1] : vector<4x8xf32> to vector<4xf32>
    %133 = vector.shape_cast %132 : vector<4xf32> to vector<4x1xf32>
    %134 = arith.mulf %108, %25 : vector<4x8x16xf32>
    %cst_56 = arith.constant 9.118820e-04 : f32
    %135 = vector.broadcast %cst_56 : f32 to vector<4x8x16xf32>
    %136 = arith.mulf %134, %135 : vector<4x8x16xf32>
    %cst_57 = arith.constant dense<0.000000e+00> : vector<4x8xf32>
    %137 = vector.multi_reduction <add>, %136, %cst_57 [2] : vector<4x8x16xf32> to vector<4x8xf32>
    %138 = math.log1p %137 : vector<4x8xf32>
    %cst_58 = arith.constant dense<0.000000e+00> : vector<4xf32>
    %139 = vector.multi_reduction <add>, %138, %cst_58 [1] : vector<4x8xf32> to vector<4xf32>
    %140 = vector.shape_cast %139 : vector<4xf32> to vector<4x1xf32>
    %cst_59 = arith.constant 7.500000e-01 : f32
    %141 = vector.broadcast %cst_59 : f32 to vector<4x8x16xf32>
    %142 = arith.subf %18, %141 : vector<4x8x16xf32>
    %143 = arith.mulf %142, %142 : vector<4x8x16xf32>
    %cst_60 = arith.constant -5.000000e+01 : f32
    %144 = vector.broadcast %cst_60 : f32 to vector<4x8x16xf32>
    %145 = arith.mulf %144, %143 : vector<4x8x16xf32>
    %146 = math.exp %145 : vector<4x8x16xf32>
    %147 = arith.mulf %146, %26 : vector<4x8x16xf32>
    %cst_61 = arith.constant 442413.406 : f32
    %148 = vector.broadcast %cst_61 : f32 to vector<4x8x16xf32>
    %149 = arith.mulf %147, %148 : vector<4x8x16xf32>
    %cst_62 = arith.constant dense<0.000000e+00> : vector<4x8xf32>
    %150 = vector.multi_reduction <add>, %149, %cst_62 [2] : vector<4x8x16xf32> to vector<4x8xf32>
    %151 = math.log1p %150 : vector<4x8xf32>
    %cst_63 = arith.constant dense<0.000000e+00> : vector<4xf32>
    %152 = vector.multi_reduction <add>, %151, %cst_63 [1] : vector<4x8xf32> to vector<4xf32>
    %153 = vector.shape_cast %152 : vector<4xf32> to vector<4x1xf32>
    %154 = arith.mulf %146, %24 : vector<4x8x16xf32>
    %cst_64 = arith.constant 1096.63318 : f32
    %155 = vector.broadcast %cst_64 : f32 to vector<4x8x16xf32>
    %156 = arith.mulf %154, %155 : vector<4x8x16xf32>
    %cst_65 = arith.constant dense<0.000000e+00> : vector<4x8xf32>
    %157 = vector.multi_reduction <add>, %156, %cst_65 [2] : vector<4x8x16xf32> to vector<4x8xf32>
    %158 = math.log1p %157 : vector<4x8xf32>
    %cst_66 = arith.constant dense<0.000000e+00> : vector<4xf32>
    %159 = vector.multi_reduction <add>, %158, %cst_66 [1] : vector<4x8xf32> to vector<4xf32>
    %160 = vector.shape_cast %159 : vector<4xf32> to vector<4x1xf32>
    %cst_67 = arith.constant dense<0.000000e+00> : vector<4x8xf32>
    %161 = vector.multi_reduction <add>, %146, %cst_67 [2] : vector<4x8x16xf32> to vector<4x8xf32>
    %162 = math.log1p %161 : vector<4x8xf32>
    %cst_68 = arith.constant dense<0.000000e+00> : vector<4xf32>
    %163 = vector.multi_reduction <add>, %162, %cst_68 [1] : vector<4x8xf32> to vector<4xf32>
    %164 = vector.shape_cast %163 : vector<4xf32> to vector<4x1xf32>
    %165 = arith.mulf %146, %21 : vector<4x8x16xf32>
    %cst_69 = arith.constant 3.35462624E-4 : f32
    %166 = vector.broadcast %cst_69 : f32 to vector<4x8x16xf32>
    %167 = arith.mulf %165, %166 : vector<4x8x16xf32>
    %cst_70 = arith.constant dense<0.000000e+00> : vector<4x8xf32>
    %168 = vector.multi_reduction <add>, %167, %cst_70 [2] : vector<4x8x16xf32> to vector<4x8xf32>
    %169 = math.log1p %168 : vector<4x8xf32>
    %cst_71 = arith.constant dense<0.000000e+00> : vector<4xf32>
    %170 = vector.multi_reduction <add>, %169, %cst_71 [1] : vector<4x8xf32> to vector<4xf32>
    %171 = vector.shape_cast %170 : vector<4xf32> to vector<4x1xf32>
    %172 = arith.mulf %146, %25 : vector<4x8x16xf32>
    %cst_72 = arith.constant 4.13993781E-8 : f32
    %173 = vector.broadcast %cst_72 : f32 to vector<4x8x16xf32>
    %174 = arith.mulf %172, %173 : vector<4x8x16xf32>
    %cst_73 = arith.constant dense<0.000000e+00> : vector<4x8xf32>
    %175 = vector.multi_reduction <add>, %174, %cst_73 [2] : vector<4x8x16xf32> to vector<4x8xf32>
    %176 = math.log1p %175 : vector<4x8xf32>
    %cst_74 = arith.constant dense<0.000000e+00> : vector<4xf32>
    %177 = vector.multi_reduction <add>, %176, %cst_74 [1] : vector<4x8xf32> to vector<4xf32>
    %178 = vector.shape_cast %177 : vector<4xf32> to vector<4x1xf32>
    %cst_75 = arith.constant 1.000000e+00 : f32
    %179 = vector.broadcast %cst_75 : f32 to vector<4x8x16xf32>
    %180 = arith.subf %18, %179 : vector<4x8x16xf32>
    %181 = arith.mulf %180, %180 : vector<4x8x16xf32>
    %cst_76 = arith.constant -5.000000e+05 : f32
    %182 = vector.broadcast %cst_76 : f32 to vector<4x8x16xf32>
    %183 = arith.mulf %181, %182 : vector<4x8x16xf32>
    %184 = math.exp %183 : vector<4x8x16xf32>
    %cst_77 = arith.constant dense<0.000000e+00> : vector<4x8xf32>
    %185 = vector.multi_reduction <add>, %184, %cst_77 [2] : vector<4x8x16xf32> to vector<4x8xf32>
    %186 = math.log1p %185 : vector<4x8xf32>
    %cst_78 = arith.constant dense<0.000000e+00> : vector<4xf32>
    %187 = vector.multi_reduction <add>, %186, %cst_78 [1] : vector<4x8xf32> to vector<4xf32>
    %188 = vector.shape_cast %187 : vector<4xf32> to vector<4x1xf32>
    %189 = tpu.concatenate %39, %46, %50, %57, %64, %77, %84, %88, %95, %102, %115, %122, %126, %133, %140, %153 in 1 : vector<4x1xf32>, vector<4x1xf32>, vector<4x1xf32>, vector<4x1xf32>, vector<4x1xf32>, vector<4x1xf32>, vector<4x1xf32>, vector<4x1xf32>, vector<4x1xf32>, vector<4x1xf32>, vector<4x1xf32>, vector<4x1xf32>, vector<4x1xf32>, vector<4x1xf32>, vector<4x1xf32>, vector<4x1xf32> -> vector<4x16xf32>
    %190 = tpu.concatenate %160, %164, %171, %178, %188 in 1 : vector<4x1xf32>, vector<4x1xf32>, vector<4x1xf32>, vector<4x1xf32>, vector<4x1xf32> -> vector<4x5xf32>
    %191 = tpu.concatenate %189, %190 in 1 : vector<4x16xf32>, vector<4x5xf32> -> vector<4x21xf32>
    %cst_79 = arith.constant 0.000000e+00 : f32
    %192 = vector.broadcast %cst_79 : f32 to vector<4x21xf32>
    %193 = arith.maximumf %191, %192 : vector<4x21xf32>
    %c0_80 = arith.constant 0 : index
    %c0_81 = arith.constant 0 : index
    %194 = vector.load %arg3[%c0_80, %c0_81] : memref<21x10xf32, #tpu.memory_space<vmem>>, vector<21x10xf32>
    %cst_82 = arith.constant dense<0.000000e+00> : vector<4x10xf32>
    %195 = tpu.matmul %193, %194, %cst_82 {dimension_numbers = #tpu.dot_dimension_numbers<[1], [0], [0], [1], [0, 0, 1, 1], [], []>} : vector<4x21xf32>, vector<21x10xf32>, vector<4x10xf32> -> vector<4x10xf32>
    %c0_83 = arith.constant 0 : index
    %c0_84 = arith.constant 0 : index
    %196 = vector.load %arg4[%c0_83, %c0_84] : memref<1x10xf32, #tpu.memory_space<vmem>>, vector<1x10xf32>
    %197 = vector.broadcast %196 : vector<1x10xf32> to vector<4x10xf32>
    %198 = arith.addf %195, %197 : vector<4x10xf32>
    %cst_85 = arith.constant 0.000000e+00 : f32
    %199 = vector.broadcast %cst_85 : f32 to vector<4x10xf32>
    %200 = arith.maximumf %198, %199 : vector<4x10xf32>
    %c0_86 = arith.constant 0 : index
    %c0_87 = arith.constant 0 : index
    %201 = vector.load %arg5[%c0_86, %c0_87] : memref<10x5xf32, #tpu.memory_space<vmem>>, vector<10x5xf32>
    %cst_88 = arith.constant dense<0.000000e+00> : vector<4x5xf32>
    %202 = tpu.matmul %200, %201, %cst_88 {dimension_numbers = #tpu.dot_dimension_numbers<[1], [0], [0], [1], [0, 0, 1, 1], [], []>} : vector<4x10xf32>, vector<10x5xf32>, vector<4x5xf32> -> vector<4x5xf32>
    %c0_89 = arith.constant 0 : index
    %c0_90 = arith.constant 0 : index
    %203 = vector.load %arg6[%c0_89, %c0_90] : memref<1x5xf32, #tpu.memory_space<vmem>>, vector<1x5xf32>
    %204 = vector.broadcast %203 : vector<1x5xf32> to vector<4x5xf32>
    %205 = arith.addf %202, %204 : vector<4x5xf32>
    %cst_91 = arith.constant 0.000000e+00 : f32
    %206 = vector.broadcast %cst_91 : f32 to vector<4x5xf32>
    %207 = arith.maximumf %205, %206 : vector<4x5xf32>
    %c0_92 = arith.constant 0 : index
    %c0_93 = arith.constant 0 : index
    %208 = vector.load %arg7[%c0_92, %c0_93] : memref<5x1xf32, #tpu.memory_space<vmem>>, vector<5x1xf32>
    %cst_94 = arith.constant dense<0.000000e+00> : vector<4x1xf32>
    %209 = tpu.matmul %207, %208, %cst_94 {dimension_numbers = #tpu.dot_dimension_numbers<[1], [0], [0], [1], [0, 0, 1, 1], [], []>} : vector<4x5xf32>, vector<5x1xf32>, vector<4x1xf32> -> vector<4x1xf32>
    %c0_95 = arith.constant 0 : index
    %c0_96 = arith.constant 0 : index
    %210 = vector.load %arg8[%c0_95, %c0_96] : memref<1x1xf32, #tpu.memory_space<vmem>>, vector<1x1xf32>
    %211 = vector.broadcast %210 : vector<1x1xf32> to vector<4x1xf32>
    %212 = arith.addf %209, %211 : vector<4x1xf32>
    %213 = vector.shape_cast %212 : vector<4x1xf32> to vector<4x1xf32>
    %214 = vector.broadcast %213 : vector<4x1xf32> to vector<4x128xf32>
    %c0_97 = arith.constant 0 : index
    %c0_98 = arith.constant 0 : index
    %215 = vector.load %arg9[%c0_97, %c0_98] : memref<4x128xf32, #tpu.memory_space<vmem>>, vector<4x128xf32>
    tpu.vector_store %arg9[%c0_97, %c0_98], %214 {strides = array<i32>} : memref<4x128xf32, #tpu.memory_space<vmem>>, vector<4x128xf32>,
    return
  }
  func.func @transform_0(%arg0: i32) -> (i32, i32, i32) {
    %c0_i32 = arith.constant 0 : i32
    %c0_i32_0 = arith.constant 0 : i32
    %c0_i32_1 = arith.constant 0 : i32
    return %arg0, %c0_i32, %c0_i32_0 : i32, i32, i32
  }
  func.func @transform_1(%arg0: i32) -> (i32, i32, i32) {
    %c0_i32 = arith.constant 0 : i32
    %c0_i32_0 = arith.constant 0 : i32
    %c0_i32_1 = arith.constant 0 : i32
    return %arg0, %c0_i32, %c0_i32_0 : i32, i32, i32
  }
  func.func @transform_2(%arg0: i32) -> (i32, i32) {
    %c0_i32 = arith.constant 0 : i32
    %c0_i32_0 = arith.constant 0 : i32
    %c0_i32_1 = arith.constant 0 : i32
    return %c0_i32, %c0_i32_0 : i32, i32
  }
  func.func @transform_3(%arg0: i32) -> (i32, i32) {
    %c0_i32 = arith.constant 0 : i32
    %c0_i32_0 = arith.constant 0 : i32
    %c0_i32_1 = arith.constant 0 : i32
    return %c0_i32, %c0_i32_0 : i32, i32
  }
  func.func @transform_4(%arg0: i32) -> (i32, i32) {
    %c0_i32 = arith.constant 0 : i32
    %c0_i32_0 = arith.constant 0 : i32
    %c0_i32_1 = arith.constant 0 : i32
    return %c0_i32, %c0_i32_0 : i32, i32
  }
  func.func @transform_5(%arg0: i32) -> (i32, i32) {
    %c0_i32 = arith.constant 0 : i32
    %c0_i32_0 = arith.constant 0 : i32
    %c0_i32_1 = arith.constant 0 : i32
    return %c0_i32, %c0_i32_0 : i32, i32
  }
  func.func @transform_6(%arg0: i32) -> (i32, i32) {
    %c0_i32 = arith.constant 0 : i32
    %c0_i32_0 = arith.constant 0 : i32
    %c0_i32_1 = arith.constant 0 : i32
    return %c0_i32, %c0_i32_0 : i32, i32
  }
  func.func @transform_7(%arg0: i32) -> (i32, i32) {
    %c0_i32 = arith.constant 0 : i32
    %c0_i32_0 = arith.constant 0 : i32
    %c0_i32_1 = arith.constant 0 : i32
    return %c0_i32, %c0_i32_0 : i32, i32
  }
  func.func @transform_8(%arg0: i32) -> (i32, i32) {
    %c0_i32 = arith.constant 0 : i32
    %c0_i32_0 = arith.constant 0 : i32
    return %arg0, %c0_i32 : i32, i32
  }
}

</mosaic_0001>

<llo_original>
// kernel: tpu_custom_call.1
$region0: #{tpu_custom_call.1}
  #allocation0 [shape = 'u32[]', space=smem, size = 0x4, offset = 0x4, fixed_abs, tag = 'smem constant byte address 0x4 - core index']
  #allocation1 [shape = 'u32[144,128]{1,0:T(1,128)}', space=vmem, size = 0x12000, scoped, tag = 'internal scratch']
  #allocation2 [shape = 'f32[1,1]{1,0:T(1,128)S(1)}', space=vmem, size = 0x200, scoped, tag = 'scoped memory for tpu_custom_call.1']
  %s0 = inlined_call_operand.hbm [shape: f32[4,8,32], index: 0, kind: input, shape index: {}]
  %s1 = inlined_call_operand.vmem [shape: f32[4,16,32], index: 1, kind: input, shape index: {}]
  %s2 = inlined_call_operand.vmem [shape: f32[21,10], index: 2, kind: input, shape index: {}]
  %s3 = inlined_call_operand.hbm [shape: f32[1,10], index: 3, kind: input, shape index: {}]
  %s4 = inlined_call_operand.vmem [shape: f32[10,5], index: 4, kind: input, shape index: {}]
  %s5 = inlined_call_operand.vmem [shape: f32[1,5], index: 5, kind: input, shape index: {}]
  %s6 = inlined_call_operand.vmem [shape: f32[5,1], index: 6, kind: input, shape index: {}]
  %s7 = inlined_call_operand.<no memory space> [shape: f32[1,1], index: 7, kind: input, shape index: {}]
  %s8 = inlined_call_operand.hbm [shape: f32[4,128], index: 8, kind: output, shape index: {}]
  %s9 = sld [smem:[#allocation0]]
  $region50: #{tpu_custom_call.1} parent=0
    _
  %s11 = ssub.s32 1, %s9
  %s12 = scalar_select 0, %s11, %s9
  %v13 = vstv %s7
  %14 = vst [vmem:[#allocation2] sm:$0x1] %v13
  $region1: #{tpu_custom_call.1} parent=0
    #allocation3 [shape = 'u8[16384]{0}', space=vmem, size = 0x4000, scoped, tag = 'input window, operand 0, single buffered']
    #allocation4 [shape = 's32[1]{0}', space=sflag, size = 0x4, scoped, tag = 'scoped memory for tpu_custom_call.1']
    #allocation5 [shape = 's32[1]{0}', space=sflag, size = 0x4, scoped, tag = 'scoped memory for tpu_custom_call.1']
    #allocation6 [shape = 'u8[512]{0}', space=vmem, size = 0x400, scoped, tag = 'input window, operand 3, single buffered']
    #allocation7 [shape = 's32[1]{0}', space=sflag, size = 0x4, scoped, tag = 'scoped memory for tpu_custom_call.1']
    #allocation8 [shape = 'u8[2048]{0}', space=vmem, size = 0x800, scoped, tag = 'output window, operand 0, single buffered']
    %15 = vsyncpa [#allocation4], 0
    %16 = vsyncpa [#allocation7], 0
    %17 = vsyncpa [#allocation5], 0
    // Predicated region
    $region2: #{tpu_custom_call.1} parent=1 // pred_check
      _
    $region3: #{tpu_custom_call.1} parent=1 // pred_check_branch
      %19 = sbr.rel (0) target = $region5
    $region4: #{tpu_custom_call.1} parent=1 // pred_region
      %s21 = ssub.s32 512, 512
      %22 = vsyncadd [#allocation4], %s21
      %s23 = sshll.u32 [#allocation3], 4
      %s24 = int_to_ptr.vmem [resolvable:$true] %s23
      %29 = dma.hbm_to_vmem [thread:$0]  %s0, 512, %s24, [#allocation4], 128, 128, 8
    $region5: #{tpu_custom_call.1} parent=1 // pred_fallthru
      _
    // Predicated region
    $region6: #{tpu_custom_call.1} parent=1 // pred_check
      _
    $region7: #{tpu_custom_call.1} parent=1 // pred_check_branch
      %31 = sbr.rel (0) target = $region9
    $region8: #{tpu_custom_call.1} parent=1 // pred_region
      _
    $region9: #{tpu_custom_call.1} parent=1 // pred_fallthru
      _
    // Predicated region
    $region10: #{tpu_custom_call.1} parent=1 // pred_check
      _
    $region11: #{tpu_custom_call.1} parent=1 // pred_check_branch
      %33 = sbr.rel (0) target = $region13
    $region12: #{tpu_custom_call.1} parent=1 // pred_region
      _
    $region13: #{tpu_custom_call.1} parent=1 // pred_fallthru
      _
    // Predicated region
    $region14: #{tpu_custom_call.1} parent=1 // pred_check
      _
    $region15: #{tpu_custom_call.1} parent=1 // pred_check_branch
      %35 = sbr.rel (0) target = $region17
    $region16: #{tpu_custom_call.1} parent=1 // pred_region
      %s37 = ssub.s32 16, 16
      %38 = vsyncadd [#allocation7], %s37
      %s40 = sshll.u32 [#allocation6], 4
      %s41 = int_to_ptr.vmem [resolvable:$true] %s40
      %43 = dma.hbm_to_vmem [thread:$0]  %s3, 16, %s41, [#allocation7]
    $region17: #{tpu_custom_call.1} parent=1 // pred_fallthru
      _
    // Predicated region
    $region18: #{tpu_custom_call.1} parent=1 // pred_check
      _
    $region19: #{tpu_custom_call.1} parent=1 // pred_check_branch
      %45 = sbr.rel (0) target = $region21
    $region20: #{tpu_custom_call.1} parent=1 // pred_region
      _
    $region21: #{tpu_custom_call.1} parent=1 // pred_fallthru
      _
    // Predicated region
    $region22: #{tpu_custom_call.1} parent=1 // pred_check
      _
    $region23: #{tpu_custom_call.1} parent=1 // pred_check_branch
      %47 = sbr.rel (0) target = $region25
    $region24: #{tpu_custom_call.1} parent=1 // pred_region
      _
    $region25: #{tpu_custom_call.1} parent=1 // pred_fallthru
      _
    // Predicated region
    $region26: #{tpu_custom_call.1} parent=1 // pred_check
      _
    $region27: #{tpu_custom_call.1} parent=1 // pred_check_branch
      %49 = sbr.rel (0) target = $region29
    $region28: #{tpu_custom_call.1} parent=1 // pred_region
      _
    $region29: #{tpu_custom_call.1} parent=1 // pred_fallthru
      _
    // Predicated region
    $region30: #{tpu_custom_call.1} parent=1 // pred_check
      _
    $region31: #{tpu_custom_call.1} parent=1 // pred_check_branch
      %51 = sbr.rel (0) target = $region33
    $region32: #{tpu_custom_call.1} parent=1 // pred_region
      _
    $region33: #{tpu_custom_call.1} parent=1 // pred_fallthru
      _
    // Predicated region
    $region34: #{tpu_custom_call.1} parent=1 // pred_check
      _
    $region35: #{tpu_custom_call.1} parent=1 // pred_check_branch
      %53 = sbr.rel (0) target = $region37
    $region36: #{tpu_custom_call.1} parent=1 // pred_region
      %54 = dma.done [#allocation4], 512
    $region37: #{tpu_custom_call.1} parent=1 // pred_fallthru
      _
    // Predicated region
    $region38: #{tpu_custom_call.1} parent=1 // pred_check
      _
    $region39: #{tpu_custom_call.1} parent=1 // pred_check_branch
      %56 = sbr.rel (0) target = $region41
    $region40: #{tpu_custom_call.1} parent=1 // pred_region
      %57 = dma.done [#allocation7], 16
    $region41: #{tpu_custom_call.1} parent=1 // pred_fallthru
      _
    %v58 = vld [vmem:[#allocation3] sm:$0xff]
    %v59 = vld [vmem:[#allocation3 + $0x8] sm:$0xff]
    %v60 = vld [vmem:[#allocation3 + $0x10] sm:$0xff]
    %v61 = vld [vmem:[#allocation3 + $0x18] sm:$0xff]
    %v62 = vld [vmem:[%s1] sm:$0xff]
    %v63 = vld [vmem:[%s1 + $0x8] sm:$0xff]
    %v64 = vld [vmem:[%s1 + $0x10] sm:$0xff]
    %v65 = vld [vmem:[%s1 + $0x18] sm:$0xff]
    %v66 = vld [vmem:[%s1 + $0x20] sm:$0xff]
    %v67 = vld [vmem:[%s1 + $0x28] sm:$0xff]
    %v68 = vld [vmem:[%s1 + $0x30] sm:$0xff]
    %v69 = vld [vmem:[%s1 + $0x38] sm:$0xff]
    %v70 = vmul.f32 %v58, %v58
    %v71 = vmul.f32 %v59, %v59
    %v72 = vmul.f32 %v60, %v60
    %v73 = vmul.f32 %v61, %v61
    %vm74 = vcmask 261120
    %v75 = vsel %vm74, %v70, 0.0
    %76 = vadd.xlane.f32.xlu0 %v75
    %v77 = vpop.xlane.xlu0 %76
    %v78 = vsel %vm74, %v71, 0.0
    %79 = vadd.xlane.f32.xlu0 %v78
    %v80 = vpop.xlane.xlu0 %79
    %v81 = vsel %vm74, %v72, 0.0
    %82 = vadd.xlane.f32.xlu0 %v81
    %v83 = vpop.xlane.xlu0 %82
    %v84 = vsel %vm74, %v73, 0.0
    %85 = vadd.xlane.f32.xlu0 %v84
    %v86 = vpop.xlane.xlu0 %85
    %v87 = vadd.f32 %v77, 1e-06
    %v88 = vadd.f32 %v80, 1e-06
    %v89 = vadd.f32 %v83, 1e-06
    %v90 = vadd.f32 %v86, 1e-06
    %v91 = vrsqrt.pop %v87
    %v92 = vrsqrt.pop %v88
    %v93 = vrsqrt.pop %v89
    %v94 = vrsqrt.pop %v90
    %v95 = vmul.f32 %v58, %v91
    %v96 = vmul.f32 %v59, %v92
    %v97 = vmul.f32 %v60, %v93
    %v98 = vmul.f32 %v61, %v94
    %v99 = vmul.f32 %v62, %v62
    %v100 = vmul.f32 %v63, %v63
    %v101 = vmul.f32 %v64, %v64
    %v102 = vmul.f32 %v65, %v65
    %v103 = vmul.f32 %v66, %v66
    %v104 = vmul.f32 %v67, %v67
    %v105 = vmul.f32 %v68, %v68
    %v106 = vmul.f32 %v69, %v69
    %v107 = vsel %vm74, %v99, 0.0
    %108 = vadd.xlane.f32.xlu0 %v107
    %v109 = vpop.xlane.xlu0 %108
    %v110 = vsel %vm74, %v100, 0.0
    %111 = vadd.xlane.f32.xlu0 %v110
    %v112 = vpop.xlane.xlu0 %111
    %v113 = vsel %vm74, %v101, 0.0
    %114 = vadd.xlane.f32.xlu0 %v113
    %v115 = vpop.xlane.xlu0 %114
    %v116 = vsel %vm74, %v102, 0.0
    %117 = vadd.xlane.f32.xlu0 %v116
    %v118 = vpop.xlane.xlu0 %117
    %v119 = vsel %vm74, %v103, 0.0
    %120 = vadd.xlane.f32.xlu0 %v119
    %v121 = vpop.xlane.xlu0 %120
    %v122 = vsel %vm74, %v104, 0.0
    %123 = vadd.xlane.f32.xlu0 %v122
    %v124 = vpop.xlane.xlu0 %123
    %v125 = vsel %vm74, %v105, 0.0
    %126 = vadd.xlane.f32.xlu0 %v125
    %v127 = vpop.xlane.xlu0 %126
    %v128 = vsel %vm74, %v106, 0.0
    %129 = vadd.xlane.f32.xlu0 %v128
    %v130 = vpop.xlane.xlu0 %129
    %v131 = vadd.f32 %v109, 1e-06
    %v132 = vadd.f32 %v112, 1e-06
    %v133 = vadd.f32 %v115, 1e-06
    %v134 = vadd.f32 %v118, 1e-06
    %v135 = vadd.f32 %v121, 1e-06
    %v136 = vadd.f32 %v124, 1e-06
    %v137 = vadd.f32 %v127, 1e-06
    %v138 = vadd.f32 %v130, 1e-06
    %v139 = vrsqrt.pop %v131
    %v140 = vrsqrt.pop %v132
    %v141 = vrsqrt.pop %v133
    %v142 = vrsqrt.pop %v134
    %v143 = vrsqrt.pop %v135
    %v144 = vrsqrt.pop %v136
    %v145 = vrsqrt.pop %v137
    %v146 = vrsqrt.pop %v138
    %v147 = vmul.f32 %v62, %v139
    %v148 = vmul.f32 %v63, %v140
    %v149 = vmul.f32 %v64, %v141
    %v150 = vmul.f32 %v65, %v142
    %v151 = vmul.f32 %v66, %v143
    %v152 = vmul.f32 %v67, %v144
    %v153 = vmul.f32 %v68, %v145
    %v154 = vmul.f32 %v69, %v146
    %v156 = vsel %vm74, %v95, 0
    %v159 = vsel %vm74, %v147, 0
    %v162 = vsel %vm74, %v148, 0
    %164 = vmatprep.subr.mxu0 0.0
    %165 = vmatpush1.xpose.msra.mxu0 %v159
    %166 = vmatprep.subr.mxu0 0.0
    %167 = vmatpush1.xpose.msra.mxu0 %v162
    %168 = vmatprep.subr.mxu0 0.0
    %169 = vmatpush1.xpose.msra.mxu0 0.0
    %170 = vmatprep.subr.mxu0 0.0
    %171 = vmatpush1.xpose.msra.mxu0 0.0
    %172 = vmatprep.subr.mxu0 0.0
    %173 = vmatpush1.xpose.msra.mxu0 0.0
    %174 = vmatprep.subr.mxu0 0.0
    %175 = vmatpush1.xpose.msra.mxu0 0.0
    %176 = vmatprep.subr.mxu0 0.0
    %177 = vmatpush1.xpose.msra.mxu0 0.0
    %178 = vmatprep.subr.mxu0 0.0
    %179 = vmatpush1.xpose.msra.mxu0 0.0
    %180 = vmatprep.subr.mxu0 0.0
    %181 = vmatpush1.xpose.msra.mxu0 0.0
    %182 = vmatprep.subr.mxu0 0.0
    %183 = vmatpush1.xpose.msra.mxu0 0.0
    %184 = vmatprep.subr.mxu0 0.0
    %185 = vmatpush1.xpose.msra.mxu0 0.0
    %186 = vmatprep.subr.mxu0 0.0
    %187 = vmatpush1.xpose.msra.mxu0 0.0
    %188 = vmatprep.subr.mxu0 0.0
    %189 = vmatpush1.xpose.msra.mxu0 0.0
    %190 = vmatprep.subr.mxu0 0.0
    %191 = vmatpush1.xpose.msra.mxu0 0.0
    %192 = vmatprep.subr.mxu0 0.0
    %193 = vmatpush1.xpose.msra.mxu0 0.0
    %194 = vmatprep.subr.mxu0 0.0
    %195 = vmatpush1.xpose.msra.mxu0 0.0
    %196 = vmatprep.subr.mxu0 0.0
    %197 = vmatpush1.xpose.msra.mxu0 0.0
    %198 = vmatprep.subr.mxu0 0.0
    %199 = vmatpush1.xpose.msra.mxu0 0.0
    %200 = vmatprep.subr.mxu0 0.0
    %201 = vmatpush1.xpose.msra.mxu0 0.0
    %202 = vmatprep.subr.mxu0 0.0
    %203 = vmatpush1.xpose.msra.mxu0 0.0
    %204 = vmatprep.subr.mxu0 0.0
    %205 = vmatpush1.xpose.msra.mxu0 0.0
    %206 = vmatprep.subr.mxu0 0.0
    %207 = vmatpush1.xpose.msra.mxu0 0.0
    %208 = vmatprep.subr.mxu0 0.0
    %209 = vmatpush1.xpose.msra.mxu0 0.0
    %210 = vmatprep.subr.mxu0 0.0
    %211 = vmatpush1.xpose.msra.mxu0 0.0
    %212 = vmatprep.subr.mxu0 0.0
    %213 = vmatpush1.xpose.msra.mxu0 0.0
    %214 = vmatprep.subr.mxu0 0.0
    %215 = vmatpush1.xpose.msra.mxu0 0.0
    %216 = vmatprep.subr.mxu0 0.0
    %217 = vmatpush1.xpose.msra.mxu0 0.0
    %218 = vmatprep.subr.mxu0 0.0
    %219 = vmatpush1.xpose.msra.mxu0 0.0
    %220 = vmatprep.subr.mxu0 0.0
    %221 = vmatpush1.xpose.msra.mxu0 0.0
    %222 = vmatprep.subr.mxu0 0.0
    %223 = vmatpush1.xpose.msra.mxu0 0.0
    %224 = vmatprep.subr.mxu0 0.0
    %225 = vmatpush1.xpose.msra.mxu0 0.0
    %226 = vmatprep.subr.mxu0 0.0
    %227 = vmatpush1.xpose.msra.mxu0 0.0
    %228 = vmatprep.mubr.f32.mxu0 0.0
    %229 = vmatmul.mubr.f32.gmra.mrb[0].mxu0 %v156
    %v230 = vpop.f32.mrb[0].mxu0
    %v231 = vadd.f32 0.0, %v230
    %v232 = vpop.f32.mrb[0].mxu0
    %233 = vdwg.mxu0
    %v235 = vsel %vm74, %v96, 0
    %v238 = vsel %vm74, %v149, 0
    %v241 = vsel %vm74, %v150, 0
    %243 = vmatprep.subr.mxu0 0.0
    %244 = vmatpush1.xpose.msra.mxu0 %v238
    %245 = vmatprep.subr.mxu0 0.0
    %246 = vmatpush1.xpose.msra.mxu0 %v241
    %247 = vmatprep.subr.mxu0 0.0
    %248 = vmatpush1.xpose.msra.mxu0 0.0
    %249 = vmatprep.subr.mxu0 0.0
    %250 = vmatpush1.xpose.msra.mxu0 0.0
    %251 = vmatprep.subr.mxu0 0.0
    %252 = vmatpush1.xpose.msra.mxu0 0.0
    %253 = vmatprep.subr.mxu0 0.0
    %254 = vmatpush1.xpose.msra.mxu0 0.0
    %255 = vmatprep.subr.mxu0 0.0
    %256 = vmatpush1.xpose.msra.mxu0 0.0
    %257 = vmatprep.subr.mxu0 0.0
    %258 = vmatpush1.xpose.msra.mxu0 0.0
    %259 = vmatprep.subr.mxu0 0.0
    %260 = vmatpush1.xpose.msra.mxu0 0.0
    %261 = vmatprep.subr.mxu0 0.0
    %262 = vmatpush1.xpose.msra.mxu0 0.0
    %263 = vmatprep.subr.mxu0 0.0
    %264 = vmatpush1.xpose.msra.mxu0 0.0
    %265 = vmatprep.subr.mxu0 0.0
    %266 = vmatpush1.xpose.msra.mxu0 0.0
    %267 = vmatprep.subr.mxu0 0.0
    %268 = vmatpush1.xpose.msra.mxu0 0.0
    %269 = vmatprep.subr.mxu0 0.0
    %270 = vmatpush1.xpose.msra.mxu0 0.0
    %271 = vmatprep.subr.mxu0 0.0
    %272 = vmatpush1.xpose.msra.mxu0 0.0
    %273 = vmatprep.subr.mxu0 0.0
    %274 = vmatpush1.xpose.msra.mxu0 0.0
    %275 = vmatprep.subr.mxu0 0.0
    %276 = vmatpush1.xpose.msra.mxu0 0.0
    %277 = vmatprep.subr.mxu0 0.0
    %278 = vmatpush1.xpose.msra.mxu0 0.0
    %279 = vmatprep.subr.mxu0 0.0
    %280 = vmatpush1.xpose.msra.mxu0 0.0
    %281 = vmatprep.subr.mxu0 0.0
    %282 = vmatpush1.xpose.msra.mxu0 0.0
    %283 = vmatprep.subr.mxu0 0.0
    %284 = vmatpush1.xpose.msra.mxu0 0.0
    %285 = vmatprep.subr.mxu0 0.0
    %286 = vmatpush1.xpose.msra.mxu0 0.0
    %287 = vmatprep.subr.mxu0 0.0
    %288 = vmatpush1.xpose.msra.mxu0 0.0
    %289 = vmatprep.subr.mxu0 0.0
    %290 = vmatpush1.xpose.msra.mxu0 0.0
    %291 = vmatprep.subr.mxu0 0.0
    %292 = vmatpush1.xpose.msra.mxu0 0.0
    %293 = vmatprep.subr.mxu0 0.0
    %294 = vmatpush1.xpose.msra.mxu0 0.0
    %295 = vmatprep.subr.mxu0 0.0
    %296 = vmatpush1.xpose.msra.mxu0 0.0
    %297 = vmatprep.subr.mxu0 0.0
    %298 = vmatpush1.xpose.msra.mxu0 0.0
    %299 = vmatprep.subr.mxu0 0.0
    %300 = vmatpush1.xpose.msra.mxu0 0.0
    %301 = vmatprep.subr.mxu0 0.0
    %302 = vmatpush1.xpose.msra.mxu0 0.0
    %303 = vmatprep.subr.mxu0 0.0
    %304 = vmatpush1.xpose.msra.mxu0 0.0
    %305 = vmatprep.subr.mxu0 0.0
    %306 = vmatpush1.xpose.msra.mxu0 0.0
    %307 = vmatprep.mubr.f32.mxu0 0.0
    %308 = vmatmul.mubr.f32.gmra.mrb[0].mxu0 %v235
    %v309 = vpop.f32.mrb[0].mxu0
    %v310 = vadd.f32 0.0, %v309
    %v311 = vpop.f32.mrb[0].mxu0
    %312 = vdwg.mxu0
    %v314 = vsel %vm74, %v97, 0
    %v317 = vsel %vm74, %v151, 0
    %v320 = vsel %vm74, %v152, 0
    %322 = vmatprep.subr.mxu0 0.0
    %323 = vmatpush1.xpose.msra.mxu0 %v317
    %324 = vmatprep.subr.mxu0 0.0
    %325 = vmatpush1.xpose.msra.mxu0 %v320
    %326 = vmatprep.subr.mxu0 0.0
    %327 = vmatpush1.xpose.msra.mxu0 0.0
    %328 = vmatprep.subr.mxu0 0.0
    %329 = vmatpush1.xpose.msra.mxu0 0.0
    %330 = vmatprep.subr.mxu0 0.0
    %331 = vmatpush1.xpose.msra.mxu0 0.0
    %332 = vmatprep.subr.mxu0 0.0
    %333 = vmatpush1.xpose.msra.mxu0 0.0
    %334 = vmatprep.subr.mxu0 0.0
    %335 = vmatpush1.xpose.msra.mxu0 0.0
    %336 = vmatprep.subr.mxu0 0.0
    %337 = vmatpush1.xpose.msra.mxu0 0.0
    %338 = vmatprep.subr.mxu0 0.0
    %339 = vmatpush1.xpose.msra.mxu0 0.0
    %340 = vmatprep.subr.mxu0 0.0
    %341 = vmatpush1.xpose.msra.mxu0 0.0
    %342 = vmatprep.subr.mxu0 0.0
    %343 = vmatpush1.xpose.msra.mxu0 0.0
    %344 = vmatprep.subr.mxu0 0.0
    %345 = vmatpush1.xpose.msra.mxu0 0.0
    %346 = vmatprep.subr.mxu0 0.0
    %347 = vmatpush1.xpose.msra.mxu0 0.0
    %348 = vmatprep.subr.mxu0 0.0
    %349 = vmatpush1.xpose.msra.mxu0 0.0
    %350 = vmatprep.subr.mxu0 0.0
    %351 = vmatpush1.xpose.msra.mxu0 0.0
    %352 = vmatprep.subr.mxu0 0.0
    %353 = vmatpush1.xpose.msra.mxu0 0.0
    %354 = vmatprep.subr.mxu0 0.0
    %355 = vmatpush1.xpose.msra.mxu0 0.0
    %356 = vmatprep.subr.mxu0 0.0
    %357 = vmatpush1.xpose.msra.mxu0 0.0
    %358 = vmatprep.subr.mxu0 0.0
    %359 = vmatpush1.xpose.msra.mxu0 0.0
    %360 = vmatprep.subr.mxu0 0.0
    %361 = vmatpush1.xpose.msra.mxu0 0.0
    %362 = vmatprep.subr.mxu0 0.0
    %363 = vmatpush1.xpose.msra.mxu0 0.0
    %364 = vmatprep.subr.mxu0 0.0
    %365 = vmatpush1.xpose.msra.mxu0 0.0
    %366 = vmatprep.subr.mxu0 0.0
    %367 = vmatpush1.xpose.msra.mxu0 0.0
    %368 = vmatprep.subr.mxu0 0.0
    %369 = vmatpush1.xpose.msra.mxu0 0.0
    %370 = vmatprep.subr.mxu0 0.0
    %371 = vmatpush1.xpose.msra.mxu0 0.0
    %372 = vmatprep.subr.mxu0 0.0
    %373 = vmatpush1.xpose.msra.mxu0 0.0
    %374 = vmatprep.subr.mxu0 0.0
    %375 = vmatpush1.xpose.msra.mxu0 0.0
    %376 = vmatprep.subr.mxu0 0.0
    %377 = vmatpush1.xpose.msra.mxu0 0.0
    %378 = vmatprep.subr.mxu0 0.0
    %379 = vmatpush1.xpose.msra.mxu0 0.0
    %380 = vmatprep.subr.mxu0 0.0
    %381 = vmatpush1.xpose.msra.mxu0 0.0
    %382 = vmatprep.subr.mxu0 0.0
    %383 = vmatpush1.xpose.msra.mxu0 0.0
    %384 = vmatprep.subr.mxu0 0.0
    %385 = vmatpush1.xpose.msra.mxu0 0.0
    %386 = vmatprep.mubr.f32.mxu0 0.0
    %387 = vmatmul.mubr.f32.gmra.mrb[0].mxu0 %v314
    %v388 = vpop.f32.mrb[0].mxu0
    %v389 = vadd.f32 0.0, %v388
    %v390 = vpop.f32.mrb[0].mxu0
    %391 = vdwg.mxu0
    %v393 = vsel %vm74, %v98, 0
    %v396 = vsel %vm74, %v153, 0
    %v399 = vsel %vm74, %v154, 0
    %401 = vmatprep.subr.mxu0 0.0
    %402 = vmatpush1.xpose.msra.mxu0 %v396
    %403 = vmatprep.subr.mxu0 0.0
    %404 = vmatpush1.xpose.msra.mxu0 %v399
    %405 = vmatprep.subr.mxu0 0.0
    %406 = vmatpush1.xpose.msra.mxu0 0.0
    %407 = vmatprep.subr.mxu0 0.0
    %408 = vmatpush1.xpose.msra.mxu0 0.0
    %409 = vmatprep.subr.mxu0 0.0
    %410 = vmatpush1.xpose.msra.mxu0 0.0
    %411 = vmatprep.subr.mxu0 0.0
    %412 = vmatpush1.xpose.msra.mxu0 0.0
    %413 = vmatprep.subr.mxu0 0.0
    %414 = vmatpush1.xpose.msra.mxu0 0.0
    %415 = vmatprep.subr.mxu0 0.0
    %416 = vmatpush1.xpose.msra.mxu0 0.0
    %417 = vmatprep.subr.mxu0 0.0
    %418 = vmatpush1.xpose.msra.mxu0 0.0
    %419 = vmatprep.subr.mxu0 0.0
    %420 = vmatpush1.xpose.msra.mxu0 0.0
    %421 = vmatprep.subr.mxu0 0.0
    %422 = vmatpush1.xpose.msra.mxu0 0.0
    %423 = vmatprep.subr.mxu0 0.0
    %424 = vmatpush1.xpose.msra.mxu0 0.0
    %425 = vmatprep.subr.mxu0 0.0
    %426 = vmatpush1.xpose.msra.mxu0 0.0
    %427 = vmatprep.subr.mxu0 0.0
    %428 = vmatpush1.xpose.msra.mxu0 0.0
    %429 = vmatprep.subr.mxu0 0.0
    %430 = vmatpush1.xpose.msra.mxu0 0.0
    %431 = vmatprep.subr.mxu0 0.0
    %432 = vmatpush1.xpose.msra.mxu0 0.0
    %433 = vmatprep.subr.mxu0 0.0
    %434 = vmatpush1.xpose.msra.mxu0 0.0
    %435 = vmatprep.subr.mxu0 0.0
    %436 = vmatpush1.xpose.msra.mxu0 0.0
    %437 = vmatprep.subr.mxu0 0.0
    %438 = vmatpush1.xpose.msra.mxu0 0.0
    %439 = vmatprep.subr.mxu0 0.0
    %440 = vmatpush1.xpose.msra.mxu0 0.0
    %441 = vmatprep.subr.mxu0 0.0
    %442 = vmatpush1.xpose.msra.mxu0 0.0
    %443 = vmatprep.subr.mxu0 0.0
    %444 = vmatpush1.xpose.msra.mxu0 0.0
    %445 = vmatprep.subr.mxu0 0.0
    %446 = vmatpush1.xpose.msra.mxu0 0.0
    %447 = vmatprep.subr.mxu0 0.0
    %448 = vmatpush1.xpose.msra.mxu0 0.0
    %449 = vmatprep.subr.mxu0 0.0
    %450 = vmatpush1.xpose.msra.mxu0 0.0
    %451 = vmatprep.subr.mxu0 0.0
    %452 = vmatpush1.xpose.msra.mxu0 0.0
    %453 = vmatprep.subr.mxu0 0.0
    %454 = vmatpush1.xpose.msra.mxu0 0.0
    %455 = vmatprep.subr.mxu0 0.0
    %456 = vmatpush1.xpose.msra.mxu0 0.0
    %457 = vmatprep.subr.mxu0 0.0
    %458 = vmatpush1.xpose.msra.mxu0 0.0
    %459 = vmatprep.subr.mxu0 0.0
    %460 = vmatpush1.xpose.msra.mxu0 0.0
    %461 = vmatprep.subr.mxu0 0.0
    %462 = vmatpush1.xpose.msra.mxu0 0.0
    %463 = vmatprep.subr.mxu0 0.0
    %464 = vmatpush1.xpose.msra.mxu0 0.0
    %465 = vmatprep.mubr.f32.mxu0 0.0
    %466 = vmatmul.mubr.f32.gmra.mrb[0].mxu0 %v393
    %v467 = vpop.f32.mrb[0].mxu0
    %v468 = vadd.f32 0.0, %v467
    %v469 = vpop.f32.mrb[0].mxu0
    %470 = vdwg.mxu0
    %v471 = vmul.f32 %v231, 10.0
    %v472 = vmul.f32 %v310, 10.0
    %v473 = vmul.f32 %v389, 10.0
    %v474 = vmul.f32 %v468, 10.0
    %v475 = vmul.f32 %v471, 1.442695
    %v476 = vpow.pop %v475
    %v477 = vmul.f32 %v472, 1.442695
    %v478 = vpow.pop %v477
    %v479 = vmul.f32 %v473, 1.442695
    %v480 = vpow.pop %v479
    %v481 = vmul.f32 %v474, 1.442695
    %v482 = vpow.pop %v481
    %v483 = vmul.f32 %v231, -10.0
    %v484 = vmul.f32 %v310, -10.0
    %v485 = vmul.f32 %v389, -10.0
    %v486 = vmul.f32 %v468, -10.0
    %v487 = vmul.f32 %v483, 1.442695
    %v488 = vpow.pop %v487
    %v489 = vmul.f32 %v484, 1.442695
    %v490 = vpow.pop %v489
    %v491 = vmul.f32 %v485, 1.442695
    %v492 = vpow.pop %v491
    %v493 = vmul.f32 %v486, 1.442695
    %v494 = vpow.pop %v493
    %v495 = vmul.f32 %v476, %v476
    %v496 = vmul.f32 %v478, %v478
    %v497 = vmul.f32 %v480, %v480
    %v498 = vmul.f32 %v482, %v482
    %v499 = vmul.f32 %v488, %v488
    %v500 = vmul.f32 %v490, %v490
    %v501 = vmul.f32 %v492, %v492
    %v502 = vmul.f32 %v494, %v494
    %v503 = vsub.f32 %v231, -0.75
    %v504 = vsub.f32 %v310, -0.75
    %v505 = vsub.f32 %v389, -0.75
    %v506 = vsub.f32 %v468, -0.75
    %v507 = vmul.f32 %v503, %v503
    %v508 = vmul.f32 %v504, %v504
    %v509 = vmul.f32 %v505, %v505
    %v510 = vmul.f32 %v506, %v506
    %v511 = vmul.f32 %v507, -50.0
    %v512 = vmul.f32 %v508, -50.0
    %v513 = vmul.f32 %v509, -50.0
    %v514 = vmul.f32 %v510, -50.0
    %v515 = vmul.f32 %v511, 1.442695
    %v516 = vpow.pop %v515
    %v517 = vmul.f32 %v512, 1.442695
    %v518 = vpow.pop %v517
    %v519 = vmul.f32 %v513, 1.442695
    %v520 = vpow.pop %v519
    %v521 = vmul.f32 %v514, 1.442695
    %v522 = vpow.pop %v521
    %v523 = vmul.f32 %v516, %v499
    %v524 = vmul.f32 %v518, %v500
    %v525 = vmul.f32 %v520, %v501
    %v526 = vmul.f32 %v522, %v502
    %v527 = vmul.f32 %v523, 4.1399378e-08
    %v528 = vmul.f32 %v524, 4.1399378e-08
    %v529 = vmul.f32 %v525, 4.1399378e-08
    %v530 = vmul.f32 %v526, 4.1399378e-08
    %vm531 = vcmask 130048
    %v532 = vsel %vm531, %v527, 0.0
    %533 = vadd.xlane.f32.xlu0 %v532
    %v534 = vpop.xlane.xlu0 %533
    %v535 = vsel %vm531, %v528, 0.0
    %536 = vadd.xlane.f32.xlu0 %v535
    %v537 = vpop.xlane.xlu0 %536
    %v538 = vsel %vm531, %v529, 0.0
    %539 = vadd.xlane.f32.xlu0 %v538
    %v540 = vpop.xlane.xlu0 %539
    %v541 = vsel %vm531, %v530, 0.0
    %542 = vadd.xlane.f32.xlu0 %v541
    %v543 = vpop.xlane.xlu0 %542
    %v544 = vadd.f32 %v534, 1.0
    %v545 = vlog2.pop %v544
    %v546 = vmul.f32 %v545, 0.6931472
    %v547 = vmul.f32 -0.5, %v534
    %v548 = vadd.f32 %v547, 1.0
    %v549 = vmul.f32 %v548, %v534
    %v550 = vand.u32 2147483647, %v534
    %vm551 = vcmp.lt.f32.partialorder %v550, 0.0004427343
    %v552 = vsel %vm551, %v549, %v546
    %v553 = vadd.f32 %v537, 1.0
    %v554 = vlog2.pop %v553
    %v555 = vmul.f32 %v554, 0.6931472
    %v556 = vmul.f32 -0.5, %v537
    %v557 = vadd.f32 %v556, 1.0
    %v558 = vmul.f32 %v557, %v537
    %v559 = vand.u32 2147483647, %v537
    %vm560 = vcmp.lt.f32.partialorder %v559, 0.0004427343
    %v561 = vsel %vm560, %v558, %v555
    %v562 = vadd.f32 %v540, 1.0
    %v563 = vlog2.pop %v562
    %v564 = vmul.f32 %v563, 0.6931472
    %v565 = vmul.f32 -0.5, %v540
    %v566 = vadd.f32 %v565, 1.0
    %v567 = vmul.f32 %v566, %v540
    %v568 = vand.u32 2147483647, %v540
    %vm569 = vcmp.lt.f32.partialorder %v568, 0.0004427343
    %v570 = vsel %vm569, %v567, %v564
    %v571 = vadd.f32 %v543, 1.0
    %v572 = vlog2.pop %v571
    %v573 = vmul.f32 %v572, 0.6931472
    %v574 = vmul.f32 -0.5, %v543
    %v575 = vadd.f32 %v574, 1.0
    %v576 = vmul.f32 %v575, %v543
    %v577 = vand.u32 2147483647, %v543
    %vm578 = vcmp.lt.f32.partialorder %v577, 0.0004427343
    %v579 = vsel %vm578, %v576, %v573
    %v584 = vlaneseq
    %v585 = vand.u32 %v584, 127
    %v586 = vlaneseq
    %v587 = vshrl.u32 %v586, 7
    %v588 = vsub.s32 %v585, %v587
    %v589 = vrot.slane %v552, %v588
    %v590 = vlaneseq
    %v591 = vshrl.u32 %v590, 7
    %v592 = vsub.s32 %v585, %v591
    %v593 = vrot.slane %v561, %v592
    %v594 = vlaneseq
    %v595 = vshrl.u32 %v594, 7
    %v596 = vsub.s32 %v585, %v595
    %v597 = vrot.slane %v570, %v596
    %v598 = vlaneseq
    %v599 = vshrl.u32 %v598, 7
    %v600 = vsub.s32 %v585, %v599
    %v601 = vrot.slane %v579, %v600
    %vm602 = vcmask 1041409
    %v603 = vsel %vm602, %v593, %v589
    %vm604 = vcmask 1042434
    %v605 = vsel %vm604, %v597, %v603
    %vm606 = vcmask 1043459
    %v607 = vsel %vm606, %v601, %v605
    %vm609 = vcmask 60416
    %v610 = vsel %vm609, %v607, 0.0
    %611 = vadd.xlane.f32.xlu0 %v610
    %v612 = vpop.xlane.xlu0 %611
    %v613 = vmul.f32 %v516, %v488
    %v614 = vmul.f32 %v518, %v490
    %v615 = vmul.f32 %v520, %v492
    %v616 = vmul.f32 %v522, %v494
    %v617 = vmul.f32 %v613, 0.00033546262
    %v618 = vmul.f32 %v614, 0.00033546262
    %v619 = vmul.f32 %v615, 0.00033546262
    %v620 = vmul.f32 %v616, 0.00033546262
    %v621 = vsel %vm531, %v617, 0.0
    %622 = vadd.xlane.f32.xlu0 %v621
    %v623 = vpop.xlane.xlu0 %622
    %v624 = vsel %vm531, %v618, 0.0
    %625 = vadd.xlane.f32.xlu0 %v624
    %v626 = vpop.xlane.xlu0 %625
    %v627 = vsel %vm531, %v619, 0.0
    %628 = vadd.xlane.f32.xlu0 %v627
    %v629 = vpop.xlane.xlu0 %628
    %v630 = vsel %vm531, %v620, 0.0
    %631 = vadd.xlane.f32.xlu0 %v630
    %v632 = vpop.xlane.xlu0 %631
    %v633 = vadd.f32 %v623, 1.0
    %v634 = vlog2.pop %v633
    %v635 = vmul.f32 %v634, 0.6931472
    %v636 = vmul.f32 -0.5, %v623
    %v637 = vadd.f32 %v636, 1.0
    %v638 = vmul.f32 %v637, %v623
    %v639 = vand.u32 2147483647, %v623
    %vm640 = vcmp.lt.f32.partialorder %v639, 0.0004427343
    %v641 = vsel %vm640, %v638, %v635
    %v642 = vadd.f32 %v626, 1.0
    %v643 = vlog2.pop %v642
    %v644 = vmul.f32 %v643, 0.6931472
    %v645 = vmul.f32 -0.5, %v626
    %v646 = vadd.f32 %v645, 1.0
    %v647 = vmul.f32 %v646, %v626
    %v648 = vand.u32 2147483647, %v626
    %vm649 = vcmp.lt.f32.partialorder %v648, 0.0004427343
    %v650 = vsel %vm649, %v647, %v644
    %v651 = vadd.f32 %v629, 1.0
    %v652 = vlog2.pop %v651
    %v653 = vmul.f32 %v652, 0.6931472
    %v654 = vmul.f32 -0.5, %v629
    %v655 = vadd.f32 %v654, 1.0
    %v656 = vmul.f32 %v655, %v629
    %v657 = vand.u32 2147483647, %v629
    %vm658 = vcmp.lt.f32.partialorder %v657, 0.0004427343
    %v659 = vsel %vm658, %v656, %v653
    %v660 = vadd.f32 %v632, 1.0
    %v661 = vlog2.pop %v660
    %v662 = vmul.f32 %v661, 0.6931472
    %v663 = vmul.f32 -0.5, %v632
    %v664 = vadd.f32 %v663, 1.0
    %v665 = vmul.f32 %v664, %v632
    %v666 = vand.u32 2147483647, %v632
    %vm667 = vcmp.lt.f32.partialorder %v666, 0.0004427343
    %v668 = vsel %vm667, %v665, %v662
    %v673 = vlaneseq
    %v674 = vshrl.u32 %v673, 7
    %v675 = vsub.s32 %v585, %v674
    %v676 = vrot.slane %v641, %v675
    %v677 = vlaneseq
    %v678 = vshrl.u32 %v677, 7
    %v679 = vsub.s32 %v585, %v678
    %v680 = vrot.slane %v650, %v679
    %v681 = vlaneseq
    %v682 = vshrl.u32 %v681, 7
    %v683 = vsub.s32 %v585, %v682
    %v684 = vrot.slane %v659, %v683
    %v685 = vlaneseq
    %v686 = vshrl.u32 %v685, 7
    %v687 = vsub.s32 %v585, %v686
    %v688 = vrot.slane %v668, %v687
    %v689 = vsel %vm602, %v680, %v676
    %v690 = vsel %vm604, %v684, %v689
    %v691 = vsel %vm606, %v688, %v690
    %v693 = vsel %vm609, %v691, 0.0
    %694 = vadd.xlane.f32.xlu0 %v693
    %v695 = vpop.xlane.xlu0 %694
    %v696 = vsel %vm531, %v516, 0.0
    %697 = vadd.xlane.f32.xlu0 %v696
    %v698 = vpop.xlane.xlu0 %697
    %v699 = vsel %vm531, %v518, 0.0
    %700 = vadd.xlane.f32.xlu0 %v699
    %v701 = vpop.xlane.xlu0 %700
    %v702 = vsel %vm531, %v520, 0.0
    %703 = vadd.xlane.f32.xlu0 %v702
    %v704 = vpop.xlane.xlu0 %703
    %v705 = vsel %vm531, %v522, 0.0
    %706 = vadd.xlane.f32.xlu0 %v705
    %v707 = vpop.xlane.xlu0 %706
    %v708 = vadd.f32 %v698, 1.0
    %v709 = vlog2.pop %v708
    %v710 = vmul.f32 %v709, 0.6931472
    %v711 = vmul.f32 -0.5, %v698
    %v712 = vadd.f32 %v711, 1.0
    %v713 = vmul.f32 %v712, %v698
    %v714 = vand.u32 2147483647, %v698
    %vm715 = vcmp.lt.f32.partialorder %v714, 0.0004427343
    %v716 = vsel %vm715, %v713, %v710
    %v717 = vadd.f32 %v701, 1.0
    %v718 = vlog2.pop %v717
    %v719 = vmul.f32 %v718, 0.6931472
    %v720 = vmul.f32 -0.5, %v701
    %v721 = vadd.f32 %v720, 1.0
    %v722 = vmul.f32 %v721, %v701
    %v723 = vand.u32 2147483647, %v701
    %vm724 = vcmp.lt.f32.partialorder %v723, 0.0004427343
    %v725 = vsel %vm724, %v722, %v719
    %v726 = vadd.f32 %v704, 1.0
    %v727 = vlog2.pop %v726
    %v728 = vmul.f32 %v727, 0.6931472
    %v729 = vmul.f32 -0.5, %v704
    %v730 = vadd.f32 %v729, 1.0
    %v731 = vmul.f32 %v730, %v704
    %v732 = vand.u32 2147483647, %v704
    %vm733 = vcmp.lt.f32.partialorder %v732, 0.0004427343
    %v734 = vsel %vm733, %v731, %v728
    %v735 = vadd.f32 %v707, 1.0
    %v736 = vlog2.pop %v735
    %v737 = vmul.f32 %v736, 0.6931472
    %v738 = vmul.f32 -0.5, %v707
    %v739 = vadd.f32 %v738, 1.0
    %v740 = vmul.f32 %v739, %v707
    %v741 = vand.u32 2147483647, %v707
    %vm742 = vcmp.lt.f32.partialorder %v741, 0.0004427343
    %v743 = vsel %vm742, %v740, %v737
    %v748 = vlaneseq
    %v749 = vshrl.u32 %v748, 7
    %v750 = vsub.s32 %v585, %v749
    %v751 = vrot.slane %v716, %v750
    %v752 = vlaneseq
    %v753 = vshrl.u32 %v752, 7
    %v754 = vsub.s32 %v585, %v753
    %v755 = vrot.slane %v725, %v754
    %v756 = vlaneseq
    %v757 = vshrl.u32 %v756, 7
    %v758 = vsub.s32 %v585, %v757
    %v759 = vrot.slane %v734, %v758
    %v760 = vlaneseq
    %v761 = vshrl.u32 %v760, 7
    %v762 = vsub.s32 %v585, %v761
    %v763 = vrot.slane %v743, %v762
    %v764 = vsel %vm602, %v755, %v751
    %v765 = vsel %vm604, %v759, %v764
    %v766 = vsel %vm606, %v763, %v765
    %v768 = vsel %vm609, %v766, 0.0
    %769 = vadd.xlane.f32.xlu0 %v768
    %v770 = vpop.xlane.xlu0 %769
    %v771 = vmul.f32 %v516, %v476
    %v772 = vmul.f32 %v518, %v478
    %v773 = vmul.f32 %v520, %v480
    %v774 = vmul.f32 %v522, %v482
    %v775 = vmul.f32 %v771, 1096.6332
    %v776 = vmul.f32 %v772, 1096.6332
    %v777 = vmul.f32 %v773, 1096.6332
    %v778 = vmul.f32 %v774, 1096.6332
    %v779 = vsel %vm531, %v775, 0.0
    %780 = vadd.xlane.f32.xlu0 %v779
    %v781 = vpop.xlane.xlu0 %780
    %v782 = vsel %vm531, %v776, 0.0
    %783 = vadd.xlane.f32.xlu0 %v782
    %v784 = vpop.xlane.xlu0 %783
    %v785 = vsel %vm531, %v777, 0.0
    %786 = vadd.xlane.f32.xlu0 %v785
    %v787 = vpop.xlane.xlu0 %786
    %v788 = vsel %vm531, %v778, 0.0
    %789 = vadd.xlane.f32.xlu0 %v788
    %v790 = vpop.xlane.xlu0 %789
    %v791 = vadd.f32 %v781, 1.0
    %v792 = vlog2.pop %v791
    %v793 = vmul.f32 %v792, 0.6931472
    %v794 = vmul.f32 -0.5, %v781
    %v795 = vadd.f32 %v794, 1.0
    %v796 = vmul.f32 %v795, %v781
    %v797 = vand.u32 2147483647, %v781
    %vm798 = vcmp.lt.f32.partialorder %v797, 0.0004427343
    %v799 = vsel %vm798, %v796, %v793
    %v800 = vadd.f32 %v784, 1.0
    %v801 = vlog2.pop %v800
    %v802 = vmul.f32 %v801, 0.6931472
    %v803 = vmul.f32 -0.5, %v784
    %v804 = vadd.f32 %v803, 1.0
    %v805 = vmul.f32 %v804, %v784
    %v806 = vand.u32 2147483647, %v784
    %vm807 = vcmp.lt.f32.partialorder %v806, 0.0004427343
    %v808 = vsel %vm807, %v805, %v802
    %v809 = vadd.f32 %v787, 1.0
    %v810 = vlog2.pop %v809
    %v811 = vmul.f32 %v810, 0.6931472
    %v812 = vmul.f32 -0.5, %v787
    %v813 = vadd.f32 %v812, 1.0
    %v814 = vmul.f32 %v813, %v787
    %v815 = vand.u32 2147483647, %v787
    %vm816 = vcmp.lt.f32.partialorder %v815, 0.0004427343
    %v817 = vsel %vm816, %v814, %v811
    %v818 = vadd.f32 %v790, 1.0
    %v819 = vlog2.pop %v818
    %v820 = vmul.f32 %v819, 0.6931472
    %v821 = vmul.f32 -0.5, %v790
    %v822 = vadd.f32 %v821, 1.0
    %v823 = vmul.f32 %v822, %v790
    %v824 = vand.u32 2147483647, %v790
    %vm825 = vcmp.lt.f32.partialorder %v824, 0.0004427343
    %v826 = vsel %vm825, %v823, %v820
    %v831 = vlaneseq
    %v832 = vshrl.u32 %v831, 7
    %v833 = vsub.s32 %v585, %v832
    %v834 = vrot.slane %v799, %v833
    %v835 = vlaneseq
    %v836 = vshrl.u32 %v835, 7
    %v837 = vsub.s32 %v585, %v836
    %v838 = vrot.slane %v808, %v837
    %v839 = vlaneseq
    %v840 = vshrl.u32 %v839, 7
    %v841 = vsub.s32 %v585, %v840
    %v842 = vrot.slane %v817, %v841
    %v843 = vlaneseq
    %v844 = vshrl.u32 %v843, 7
    %v845 = vsub.s32 %v585, %v844
    %v846 = vrot.slane %v826, %v845
    %v847 = vsel %vm602, %v838, %v834
    %v848 = vsel %vm604, %v842, %v847
    %v849 = vsel %vm606, %v846, %v848
    %v851 = vsel %vm609, %v849, 0.0
    %852 = vadd.xlane.f32.xlu0 %v851
    %v853 = vpop.xlane.xlu0 %852
    %v854 = vmul.f32 %v516, %v495
    %v855 = vmul.f32 %v518, %v496
    %v856 = vmul.f32 %v520, %v497
    %v857 = vmul.f32 %v522, %v498
    %v858 = vmul.f32 %v854, 442413.4
    %v859 = vmul.f32 %v855, 442413.4
    %v860 = vmul.f32 %v856, 442413.4
    %v861 = vmul.f32 %v857, 442413.4
    %v862 = vsel %vm531, %v858, 0.0
    %863 = vadd.xlane.f32.xlu0 %v862
    %v864 = vpop.xlane.xlu0 %863
    %v865 = vsel %vm531, %v859, 0.0
    %866 = vadd.xlane.f32.xlu0 %v865
    %v867 = vpop.xlane.xlu0 %866
    %v868 = vsel %vm531, %v860, 0.0
    %869 = vadd.xlane.f32.xlu0 %v868
    %v870 = vpop.xlane.xlu0 %869
    %v871 = vsel %vm531, %v861, 0.0
    %872 = vadd.xlane.f32.xlu0 %v871
    %v873 = vpop.xlane.xlu0 %872
    %v874 = vadd.f32 %v864, 1.0
    %v875 = vlog2.pop %v874
    %v876 = vmul.f32 %v875, 0.6931472
    %v877 = vmul.f32 -0.5, %v864
    %v878 = vadd.f32 %v877, 1.0
    %v879 = vmul.f32 %v878, %v864
    %v880 = vand.u32 2147483647, %v864
    %vm881 = vcmp.lt.f32.partialorder %v880, 0.0004427343
    %v882 = vsel %vm881, %v879, %v876
    %v883 = vadd.f32 %v867, 1.0
    %v884 = vlog2.pop %v883
    %v885 = vmul.f32 %v884, 0.6931472
    %v886 = vmul.f32 -0.5, %v867
    %v887 = vadd.f32 %v886, 1.0
    %v888 = vmul.f32 %v887, %v867
    %v889 = vand.u32 2147483647, %v867
    %vm890 = vcmp.lt.f32.partialorder %v889, 0.0004427343
    %v891 = vsel %vm890, %v888, %v885
    %v892 = vadd.f32 %v870, 1.0
    %v893 = vlog2.pop %v892
    %v894 = vmul.f32 %v893, 0.6931472
    %v895 = vmul.f32 -0.5, %v870
    %v896 = vadd.f32 %v895, 1.0
    %v897 = vmul.f32 %v896, %v870
    %v898 = vand.u32 2147483647, %v870
    %vm899 = vcmp.lt.f32.partialorder %v898, 0.0004427343
    %v900 = vsel %vm899, %v897, %v894
    %v901 = vadd.f32 %v873, 1.0
    %v902 = vlog2.pop %v901
    %v903 = vmul.f32 %v902, 0.6931472
    %v904 = vmul.f32 -0.5, %v873
    %v905 = vadd.f32 %v904, 1.0
    %v906 = vmul.f32 %v905, %v873
    %v907 = vand.u32 2147483647, %v873
    %vm908 = vcmp.lt.f32.partialorder %v907, 0.0004427343
    %v909 = vsel %vm908, %v906, %v903
    %v914 = vlaneseq
    %v915 = vshrl.u32 %v914, 7
    %v916 = vsub.s32 %v585, %v915
    %v917 = vrot.slane %v882, %v916
    %v918 = vlaneseq
    %v919 = vshrl.u32 %v918, 7
    %v920 = vsub.s32 %v585, %v919
    %v921 = vrot.slane %v891, %v920
    %v922 = vlaneseq
    %v923 = vshrl.u32 %v922, 7
    %v924 = vsub.s32 %v585, %v923
    %v925 = vrot.slane %v900, %v924
    %v926 = vlaneseq
    %v927 = vshrl.u32 %v926, 7
    %v928 = vsub.s32 %v585, %v927
    %v929 = vrot.slane %v909, %v928
    %v930 = vsel %vm602, %v921, %v917
    %v931 = vsel %vm604, %v925, %v930
    %v932 = vsel %vm606, %v929, %v931
    %v934 = vsel %vm609, %v932, 0.0
    %935 = vadd.xlane.f32.xlu0 %v934
    %v936 = vpop.xlane.xlu0 %935
    %v937 = vsub.f32 %v231, -0.25
    %v938 = vsub.f32 %v310, -0.25
    %v939 = vsub.f32 %v389, -0.25
    %v940 = vsub.f32 %v468, -0.25
    %v941 = vmul.f32 %v937, %v937
    %v942 = vmul.f32 %v938, %v938
    %v943 = vmul.f32 %v939, %v939
    %v944 = vmul.f32 %v940, %v940
    %v945 = vmul.f32 %v941, -50.0
    %v946 = vmul.f32 %v942, -50.0
    %v947 = vmul.f32 %v943, -50.0
    %v948 = vmul.f32 %v944, -50.0
    %v949 = vmul.f32 %v945, 1.442695
    %v950 = vpow.pop %v949
    %v951 = vmul.f32 %v946, 1.442695
    %v952 = vpow.pop %v951
    %v953 = vmul.f32 %v947, 1.442695
    %v954 = vpow.pop %v953
    %v955 = vmul.f32 %v948, 1.442695
    %v956 = vpow.pop %v955
    %v957 = vmul.f32 %v950, %v499
    %v958 = vmul.f32 %v952, %v500
    %v959 = vmul.f32 %v954, %v501
    %v960 = vmul.f32 %v956, %v502
    %v961 = vmul.f32 %v957, 0.000911882
    %v962 = vmul.f32 %v958, 0.000911882
    %v963 = vmul.f32 %v959, 0.000911882
    %v964 = vmul.f32 %v960, 0.000911882
    %v965 = vsel %vm531, %v961, 0.0
    %966 = vadd.xlane.f32.xlu0 %v965
    %v967 = vpop.xlane.xlu0 %966
    %v968 = vsel %vm531, %v962, 0.0
    %969 = vadd.xlane.f32.xlu0 %v968
    %v970 = vpop.xlane.xlu0 %969
    %v971 = vsel %vm531, %v963, 0.0
    %972 = vadd.xlane.f32.xlu0 %v971
    %v973 = vpop.xlane.xlu0 %972
    %v974 = vsel %vm531, %v964, 0.0
    %975 = vadd.xlane.f32.xlu0 %v974
    %v976 = vpop.xlane.xlu0 %975
    %v977 = vadd.f32 %v967, 1.0
    %v978 = vlog2.pop %v977
    %v979 = vmul.f32 %v978, 0.6931472
    %v980 = vmul.f32 -0.5, %v967
    %v981 = vadd.f32 %v980, 1.0
    %v982 = vmul.f32 %v981, %v967
    %v983 = vand.u32 2147483647, %v967
    %vm984 = vcmp.lt.f32.partialorder %v983, 0.0004427343
    %v985 = vsel %vm984, %v982, %v979
    %v986 = vadd.f32 %v970, 1.0
    %v987 = vlog2.pop %v986
    %v988 = vmul.f32 %v987, 0.6931472
    %v989 = vmul.f32 -0.5, %v970
    %v990 = vadd.f32 %v989, 1.0
    %v991 = vmul.f32 %v990, %v970
    %v992 = vand.u32 2147483647, %v970
    %vm993 = vcmp.lt.f32.partialorder %v992, 0.0004427343
    %v994 = vsel %vm993, %v991, %v988
    %v995 = vadd.f32 %v973, 1.0
    %v996 = vlog2.pop %v995
    %v997 = vmul.f32 %v996, 0.6931472
    %v998 = vmul.f32 -0.5, %v973
    %v999 = vadd.f32 %v998, 1.0
    %v1000 = vmul.f32 %v999, %v973
    %v1001 = vand.u32 2147483647, %v973
    %vm1002 = vcmp.lt.f32.partialorder %v1001, 0.0004427343
    %v1003 = vsel %vm1002, %v1000, %v997
    %v1004 = vadd.f32 %v976, 1.0
    %v1005 = vlog2.pop %v1004
    %v1006 = vmul.f32 %v1005, 0.6931472
    %v1007 = vmul.f32 -0.5, %v976
    %v1008 = vadd.f32 %v1007, 1.0
    %v1009 = vmul.f32 %v1008, %v976
    %v1010 = vand.u32 2147483647, %v976
    %vm1011 = vcmp.lt.f32.partialorder %v1010, 0.0004427343
    %v1012 = vsel %vm1011, %v1009, %v1006
    %v1017 = vlaneseq
    %v1018 = vshrl.u32 %v1017, 7
    %v1019 = vsub.s32 %v585, %v1018
    %v1020 = vrot.slane %v985, %v1019
    %v1021 = vlaneseq
    %v1022 = vshrl.u32 %v1021, 7
    %v1023 = vsub.s32 %v585, %v1022
    %v1024 = vrot.slane %v994, %v1023
    %v1025 = vlaneseq
    %v1026 = vshrl.u32 %v1025, 7
    %v1027 = vsub.s32 %v585, %v1026
    %v1028 = vrot.slane %v1003, %v1027
    %v1029 = vlaneseq
    %v1030 = vshrl.u32 %v1029, 7
    %v1031 = vsub.s32 %v585, %v1030
    %v1032 = vrot.slane %v1012, %v1031
    %v1033 = vsel %vm602, %v1024, %v1020
    %v1034 = vsel %vm604, %v1028, %v1033
    %v1035 = vsel %vm606, %v1032, %v1034
    %v1037 = vsel %vm609, %v1035, 0.0
    %1038 = vadd.xlane.f32.xlu0 %v1037
    %v1039 = vpop.xlane.xlu0 %1038
    %v1040 = vmul.f32 %v950, %v488
    %v1041 = vmul.f32 %v952, %v490
    %v1042 = vmul.f32 %v954, %v492
    %v1043 = vmul.f32 %v956, %v494
    %v1044 = vmul.f32 %v1040, 0.049787067
    %v1045 = vmul.f32 %v1041, 0.049787067
    %v1046 = vmul.f32 %v1042, 0.049787067
    %v1047 = vmul.f32 %v1043, 0.049787067
    %v1048 = vsel %vm531, %v1044, 0.0
    %1049 = vadd.xlane.f32.xlu0 %v1048
    %v1050 = vpop.xlane.xlu0 %1049
    %v1051 = vsel %vm531, %v1045, 0.0
    %1052 = vadd.xlane.f32.xlu0 %v1051
    %v1053 = vpop.xlane.xlu0 %1052
    %v1054 = vsel %vm531, %v1046, 0.0
    %1055 = vadd.xlane.f32.xlu0 %v1054
    %v1056 = vpop.xlane.xlu0 %1055
    %v1057 = vsel %vm531, %v1047, 0.0
    %1058 = vadd.xlane.f32.xlu0 %v1057
    %v1059 = vpop.xlane.xlu0 %1058
    %v1060 = vadd.f32 %v1050, 1.0
    %v1061 = vlog2.pop %v1060
    %v1062 = vmul.f32 %v1061, 0.6931472
    %v1063 = vmul.f32 -0.5, %v1050
    %v1064 = vadd.f32 %v1063, 1.0
    %v1065 = vmul.f32 %v1064, %v1050
    %v1066 = vand.u32 2147483647, %v1050
    %vm1067 = vcmp.lt.f32.partialorder %v1066, 0.0004427343
    %v1068 = vsel %vm1067, %v1065, %v1062
    %v1069 = vadd.f32 %v1053, 1.0
    %v1070 = vlog2.pop %v1069
    %v1071 = vmul.f32 %v1070, 0.6931472
    %v1072 = vmul.f32 -0.5, %v1053
    %v1073 = vadd.f32 %v1072, 1.0
    %v1074 = vmul.f32 %v1073, %v1053
    %v1075 = vand.u32 2147483647, %v1053
    %vm1076 = vcmp.lt.f32.partialorder %v1075, 0.0004427343
    %v1077 = vsel %vm1076, %v1074, %v1071
    %v1078 = vadd.f32 %v1056, 1.0
    %v1079 = vlog2.pop %v1078
    %v1080 = vmul.f32 %v1079, 0.6931472
    %v1081 = vmul.f32 -0.5, %v1056
    %v1082 = vadd.f32 %v1081, 1.0
    %v1083 = vmul.f32 %v1082, %v1056
    %v1084 = vand.u32 2147483647, %v1056
    %vm1085 = vcmp.lt.f32.partialorder %v1084, 0.0004427343
    %v1086 = vsel %vm1085, %v1083, %v1080
    %v1087 = vadd.f32 %v1059, 1.0
    %v1088 = vlog2.pop %v1087
    %v1089 = vmul.f32 %v1088, 0.6931472
    %v1090 = vmul.f32 -0.5, %v1059
    %v1091 = vadd.f32 %v1090, 1.0
    %v1092 = vmul.f32 %v1091, %v1059
    %v1093 = vand.u32 2147483647, %v1059
    %vm1094 = vcmp.lt.f32.partialorder %v1093, 0.0004427343
    %v1095 = vsel %vm1094, %v1092, %v1089
    %v1100 = vlaneseq
    %v1101 = vshrl.u32 %v1100, 7
    %v1102 = vsub.s32 %v585, %v1101
    %v1103 = vrot.slane %v1068, %v1102
    %v1104 = vlaneseq
    %v1105 = vshrl.u32 %v1104, 7
    %v1106 = vsub.s32 %v585, %v1105
    %v1107 = vrot.slane %v1077, %v1106
    %v1108 = vlaneseq
    %v1109 = vshrl.u32 %v1108, 7
    %v1110 = vsub.s32 %v585, %v1109
    %v1111 = vrot.slane %v1086, %v1110
    %v1112 = vlaneseq
    %v1113 = vshrl.u32 %v1112, 7
    %v1114 = vsub.s32 %v585, %v1113
    %v1115 = vrot.slane %v1095, %v1114
    %v1116 = vsel %vm602, %v1107, %v1103
    %v1117 = vsel %vm604, %v1111, %v1116
    %v1118 = vsel %vm606, %v1115, %v1117
    %v1120 = vsel %vm609, %v1118, 0.0
    %1121 = vadd.xlane.f32.xlu0 %v1120
    %v1122 = vpop.xlane.xlu0 %1121
    %v1123 = vsel %vm531, %v950, 0.0
    %1124 = vadd.xlane.f32.xlu0 %v1123
    %v1125 = vpop.xlane.xlu0 %1124
    %v1126 = vsel %vm531, %v952, 0.0
    %1127 = vadd.xlane.f32.xlu0 %v1126
    %v1128 = vpop.xlane.xlu0 %1127
    %v1129 = vsel %vm531, %v954, 0.0
    %1130 = vadd.xlane.f32.xlu0 %v1129
    %v1131 = vpop.xlane.xlu0 %1130
    %v1132 = vsel %vm531, %v956, 0.0
    %1133 = vadd.xlane.f32.xlu0 %v1132
    %v1134 = vpop.xlane.xlu0 %1133
    %v1135 = vadd.f32 %v1125, 1.0
    %v1136 = vlog2.pop %v1135
    %v1137 = vmul.f32 %v1136, 0.6931472
    %v1138 = vmul.f32 -0.5, %v1125
    %v1139 = vadd.f32 %v1138, 1.0
    %v1140 = vmul.f32 %v1139, %v1125
    %v1141 = vand.u32 2147483647, %v1125
    %vm1142 = vcmp.lt.f32.partialorder %v1141, 0.0004427343
    %v1143 = vsel %vm1142, %v1140, %v1137
    %v1144 = vadd.f32 %v1128, 1.0
    %v1145 = vlog2.pop %v1144
    %v1146 = vmul.f32 %v1145, 0.6931472
    %v1147 = vmul.f32 -0.5, %v1128
    %v1148 = vadd.f32 %v1147, 1.0
    %v1149 = vmul.f32 %v1148, %v1128
    %v1150 = vand.u32 2147483647, %v1128
    %vm1151 = vcmp.lt.f32.partialorder %v1150, 0.0004427343
    %v1152 = vsel %vm1151, %v1149, %v1146
    %v1153 = vadd.f32 %v1131, 1.0
    %v1154 = vlog2.pop %v1153
    %v1155 = vmul.f32 %v1154, 0.6931472
    %v1156 = vmul.f32 -0.5, %v1131
    %v1157 = vadd.f32 %v1156, 1.0
    %v1158 = vmul.f32 %v1157, %v1131
    %v1159 = vand.u32 2147483647, %v1131
    %vm1160 = vcmp.lt.f32.partialorder %v1159, 0.0004427343
    %v1161 = vsel %vm1160, %v1158, %v1155
    %v1162 = vadd.f32 %v1134, 1.0
    %v1163 = vlog2.pop %v1162
    %v1164 = vmul.f32 %v1163, 0.6931472
    %v1165 = vmul.f32 -0.5, %v1134
    %v1166 = vadd.f32 %v1165, 1.0
    %v1167 = vmul.f32 %v1166, %v1134
    %v1168 = vand.u32 2147483647, %v1134
    %vm1169 = vcmp.lt.f32.partialorder %v1168, 0.0004427343
    %v1170 = vsel %vm1169, %v1167, %v1164
    %v1175 = vlaneseq
    %v1176 = vshrl.u32 %v1175, 7
    %v1177 = vsub.s32 %v585, %v1176
    %v1178 = vrot.slane %v1143, %v1177
    %v1179 = vlaneseq
    %v1180 = vshrl.u32 %v1179, 7
    %v1181 = vsub.s32 %v585, %v1180
    %v1182 = vrot.slane %v1152, %v1181
    %v1183 = vlaneseq
    %v1184 = vshrl.u32 %v1183, 7
    %v1185 = vsub.s32 %v585, %v1184
    %v1186 = vrot.slane %v1161, %v1185
    %v1187 = vlaneseq
    %v1188 = vshrl.u32 %v1187, 7
    %v1189 = vsub.s32 %v585, %v1188
    %v1190 = vrot.slane %v1170, %v1189
    %v1191 = vsel %vm602, %v1182, %v1178
    %v1192 = vsel %vm604, %v1186, %v1191
    %v1193 = vsel %vm606, %v1190, %v1192
    %v1195 = vsel %vm609, %v1193, 0.0
    %1196 = vadd.xlane.f32.xlu0 %v1195
    %v1197 = vpop.xlane.xlu0 %1196
    %v1198 = vmul.f32 %v950, %v476
    %v1199 = vmul.f32 %v952, %v478
    %v1200 = vmul.f32 %v954, %v480
    %v1201 = vmul.f32 %v956, %v482
    %v1202 = vmul.f32 %v1198, 7.389056
    %v1203 = vmul.f32 %v1199, 7.389056
    %v1204 = vmul.f32 %v1200, 7.389056
    %v1205 = vmul.f32 %v1201, 7.389056
    %v1206 = vsel %vm531, %v1202, 0.0
    %1207 = vadd.xlane.f32.xlu0 %v1206
    %v1208 = vpop.xlane.xlu0 %1207
    %v1209 = vsel %vm531, %v1203, 0.0
    %1210 = vadd.xlane.f32.xlu0 %v1209
    %v1211 = vpop.xlane.xlu0 %1210
    %v1212 = vsel %vm531, %v1204, 0.0
    %1213 = vadd.xlane.f32.xlu0 %v1212
    %v1214 = vpop.xlane.xlu0 %1213
    %v1215 = vsel %vm531, %v1205, 0.0
    %1216 = vadd.xlane.f32.xlu0 %v1215
    %v1217 = vpop.xlane.xlu0 %1216
    %v1218 = vadd.f32 %v1208, 1.0
    %v1219 = vlog2.pop %v1218
    %v1220 = vmul.f32 %v1219, 0.6931472
    %v1221 = vmul.f32 -0.5, %v1208
    %v1222 = vadd.f32 %v1221, 1.0
    %v1223 = vmul.f32 %v1222, %v1208
    %v1224 = vand.u32 2147483647, %v1208
    %vm1225 = vcmp.lt.f32.partialorder %v1224, 0.0004427343
    %v1226 = vsel %vm1225, %v1223, %v1220
    %v1227 = vadd.f32 %v1211, 1.0
    %v1228 = vlog2.pop %v1227
    %v1229 = vmul.f32 %v1228, 0.6931472
    %v1230 = vmul.f32 -0.5, %v1211
    %v1231 = vadd.f32 %v1230, 1.0
    %v1232 = vmul.f32 %v1231, %v1211
    %v1233 = vand.u32 2147483647, %v1211
    %vm1234 = vcmp.lt.f32.partialorder %v1233, 0.0004427343
    %v1235 = vsel %vm1234, %v1232, %v1229
    %v1236 = vadd.f32 %v1214, 1.0
    %v1237 = vlog2.pop %v1236
    %v1238 = vmul.f32 %v1237, 0.6931472
    %v1239 = vmul.f32 -0.5, %v1214
    %v1240 = vadd.f32 %v1239, 1.0
    %v1241 = vmul.f32 %v1240, %v1214
    %v1242 = vand.u32 2147483647, %v1214
    %vm1243 = vcmp.lt.f32.partialorder %v1242, 0.0004427343
    %v1244 = vsel %vm1243, %v1241, %v1238
    %v1245 = vadd.f32 %v1217, 1.0
    %v1246 = vlog2.pop %v1245
    %v1247 = vmul.f32 %v1246, 0.6931472
    %v1248 = vmul.f32 -0.5, %v1217
    %v1249 = vadd.f32 %v1248, 1.0
    %v1250 = vmul.f32 %v1249, %v1217
    %v1251 = vand.u32 2147483647, %v1217
    %vm1252 = vcmp.lt.f32.partialorder %v1251, 0.0004427343
    %v1253 = vsel %vm1252, %v1250, %v1247
    %v1258 = vlaneseq
    %v1259 = vshrl.u32 %v1258, 7
    %v1260 = vsub.s32 %v585, %v1259
    %v1261 = vrot.slane %v1226, %v1260
    %v1262 = vlaneseq
    %v1263 = vshrl.u32 %v1262, 7
    %v1264 = vsub.s32 %v585, %v1263
    %v1265 = vrot.slane %v1235, %v1264
    %v1266 = vlaneseq
    %v1267 = vshrl.u32 %v1266, 7
    %v1268 = vsub.s32 %v585, %v1267
    %v1269 = vrot.slane %v1244, %v1268
    %v1270 = vlaneseq
    %v1271 = vshrl.u32 %v1270, 7
    %v1272 = vsub.s32 %v585, %v1271
    %v1273 = vrot.slane %v1253, %v1272
    %v1274 = vsel %vm602, %v1265, %v1261
    %v1275 = vsel %vm604, %v1269, %v1274
    %v1276 = vsel %vm606, %v1273, %v1275
    %v1278 = vsel %vm609, %v1276, 0.0
    %1279 = vadd.xlane.f32.xlu0 %v1278
    %v1280 = vpop.xlane.xlu0 %1279
    %v1281 = vmul.f32 %v950, %v495
    %v1282 = vmul.f32 %v952, %v496
    %v1283 = vmul.f32 %v954, %v497
    %v1284 = vmul.f32 %v956, %v498
    %v1285 = vmul.f32 %v1281, 20.085537
    %v1286 = vmul.f32 %v1282, 20.085537
    %v1287 = vmul.f32 %v1283, 20.085537
    %v1288 = vmul.f32 %v1284, 20.085537
    %v1289 = vsel %vm531, %v1285, 0.0
    %1290 = vadd.xlane.f32.xlu0 %v1289
    %v1291 = vpop.xlane.xlu0 %1290
    %v1292 = vsel %vm531, %v1286, 0.0
    %1293 = vadd.xlane.f32.xlu0 %v1292
    %v1294 = vpop.xlane.xlu0 %1293
    %v1295 = vsel %vm531, %v1287, 0.0
    %1296 = vadd.xlane.f32.xlu0 %v1295
    %v1297 = vpop.xlane.xlu0 %1296
    %v1298 = vsel %vm531, %v1288, 0.0
    %1299 = vadd.xlane.f32.xlu0 %v1298
    %v1300 = vpop.xlane.xlu0 %1299
    %v1301 = vadd.f32 %v1291, 1.0
    %v1302 = vlog2.pop %v1301
    %v1303 = vmul.f32 %v1302, 0.6931472
    %v1304 = vmul.f32 -0.5, %v1291
    %v1305 = vadd.f32 %v1304, 1.0
    %v1306 = vmul.f32 %v1305, %v1291
    %v1307 = vand.u32 2147483647, %v1291
    %vm1308 = vcmp.lt.f32.partialorder %v1307, 0.0004427343
    %v1309 = vsel %vm1308, %v1306, %v1303
    %v1310 = vadd.f32 %v1294, 1.0
    %v1311 = vlog2.pop %v1310
    %v1312 = vmul.f32 %v1311, 0.6931472
    %v1313 = vmul.f32 -0.5, %v1294
    %v1314 = vadd.f32 %v1313, 1.0
    %v1315 = vmul.f32 %v1314, %v1294
    %v1316 = vand.u32 2147483647, %v1294
    %vm1317 = vcmp.lt.f32.partialorder %v1316, 0.0004427343
    %v1318 = vsel %vm1317, %v1315, %v1312
    %v1319 = vadd.f32 %v1297, 1.0
    %v1320 = vlog2.pop %v1319
    %v1321 = vmul.f32 %v1320, 0.6931472
    %v1322 = vmul.f32 -0.5, %v1297
    %v1323 = vadd.f32 %v1322, 1.0
    %v1324 = vmul.f32 %v1323, %v1297
    %v1325 = vand.u32 2147483647, %v1297
    %vm1326 = vcmp.lt.f32.partialorder %v1325, 0.0004427343
    %v1327 = vsel %vm1326, %v1324, %v1321
    %v1328 = vadd.f32 %v1300, 1.0
    %v1329 = vlog2.pop %v1328
    %v1330 = vmul.f32 %v1329, 0.6931472
    %v1331 = vmul.f32 -0.5, %v1300
    %v1332 = vadd.f32 %v1331, 1.0
    %v1333 = vmul.f32 %v1332, %v1300
    %v1334 = vand.u32 2147483647, %v1300
    %vm1335 = vcmp.lt.f32.partialorder %v1334, 0.0004427343
    %v1336 = vsel %vm1335, %v1333, %v1330
    %v1341 = vlaneseq
    %v1342 = vshrl.u32 %v1341, 7
    %v1343 = vsub.s32 %v585, %v1342
    %v1344 = vrot.slane %v1309, %v1343
    %v1345 = vlaneseq
    %v1346 = vshrl.u32 %v1345, 7
    %v1347 = vsub.s32 %v585, %v1346
    %v1348 = vrot.slane %v1318, %v1347
    %v1349 = vlaneseq
    %v1350 = vshrl.u32 %v1349, 7
    %v1351 = vsub.s32 %v585, %v1350
    %v1352 = vrot.slane %v1327, %v1351
    %v1353 = vlaneseq
    %v1354 = vshrl.u32 %v1353, 7
    %v1355 = vsub.s32 %v585, %v1354
    %v1356 = vrot.slane %v1336, %v1355
    %v1357 = vsel %vm602, %v1348, %v1344
    %v1358 = vsel %vm604, %v1352, %v1357
    %v1359 = vsel %vm606, %v1356, %v1358
    %v1361 = vsel %vm609, %v1359, 0.0
    %1362 = vadd.xlane.f32.xlu0 %v1361
    %v1363 = vpop.xlane.xlu0 %1362
    %v1364 = vsub.f32 %v231, 0.25
    %v1365 = vsub.f32 %v310, 0.25
    %v1366 = vsub.f32 %v389, 0.25
    %v1367 = vsub.f32 %v468, 0.25
    %v1368 = vmul.f32 %v1364, %v1364
    %v1369 = vmul.f32 %v1365, %v1365
    %v1370 = vmul.f32 %v1366, %v1366
    %v1371 = vmul.f32 %v1367, %v1367
    %v1372 = vmul.f32 %v1368, -50.0
    %v1373 = vmul.f32 %v1369, -50.0
    %v1374 = vmul.f32 %v1370, -50.0
    %v1375 = vmul.f32 %v1371, -50.0
    %v1376 = vmul.f32 %v1372, 1.442695
    %v1377 = vpow.pop %v1376
    %v1378 = vmul.f32 %v1373, 1.442695
    %v1379 = vpow.pop %v1378
    %v1380 = vmul.f32 %v1374, 1.442695
    %v1381 = vpow.pop %v1380
    %v1382 = vmul.f32 %v1375, 1.442695
    %v1383 = vpow.pop %v1382
    %v1384 = vmul.f32 %v1377, %v499
    %v1385 = vmul.f32 %v1379, %v500
    %v1386 = vmul.f32 %v1381, %v501
    %v1387 = vmul.f32 %v1383, %v502
    %v1388 = vmul.f32 %v1384, 20.085537
    %v1389 = vmul.f32 %v1385, 20.085537
    %v1390 = vmul.f32 %v1386, 20.085537
    %v1391 = vmul.f32 %v1387, 20.085537
    %v1392 = vsel %vm531, %v1388, 0.0
    %1393 = vadd.xlane.f32.xlu0 %v1392
    %v1394 = vpop.xlane.xlu0 %1393
    %v1395 = vsel %vm531, %v1389, 0.0
    %1396 = vadd.xlane.f32.xlu0 %v1395
    %v1397 = vpop.xlane.xlu0 %1396
    %v1398 = vsel %vm531, %v1390, 0.0
    %1399 = vadd.xlane.f32.xlu0 %v1398
    %v1400 = vpop.xlane.xlu0 %1399
    %v1401 = vsel %vm531, %v1391, 0.0
    %1402 = vadd.xlane.f32.xlu0 %v1401
    %v1403 = vpop.xlane.xlu0 %1402
    %v1404 = vadd.f32 %v1394, 1.0
    %v1405 = vlog2.pop %v1404
    %v1406 = vmul.f32 %v1405, 0.6931472
    %v1407 = vmul.f32 -0.5, %v1394
    %v1408 = vadd.f32 %v1407, 1.0
    %v1409 = vmul.f32 %v1408, %v1394
    %v1410 = vand.u32 2147483647, %v1394
    %vm1411 = vcmp.lt.f32.partialorder %v1410, 0.0004427343
    %v1412 = vsel %vm1411, %v1409, %v1406
    %v1413 = vadd.f32 %v1397, 1.0
    %v1414 = vlog2.pop %v1413
    %v1415 = vmul.f32 %v1414, 0.6931472
    %v1416 = vmul.f32 -0.5, %v1397
    %v1417 = vadd.f32 %v1416, 1.0
    %v1418 = vmul.f32 %v1417, %v1397
    %v1419 = vand.u32 2147483647, %v1397
    %vm1420 = vcmp.lt.f32.partialorder %v1419, 0.0004427343
    %v1421 = vsel %vm1420, %v1418, %v1415
    %v1422 = vadd.f32 %v1400, 1.0
    %v1423 = vlog2.pop %v1422
    %v1424 = vmul.f32 %v1423, 0.6931472
    %v1425 = vmul.f32 -0.5, %v1400
    %v1426 = vadd.f32 %v1425, 1.0
    %v1427 = vmul.f32 %v1426, %v1400
    %v1428 = vand.u32 2147483647, %v1400
    %vm1429 = vcmp.lt.f32.partialorder %v1428, 0.0004427343
    %v1430 = vsel %vm1429, %v1427, %v1424
    %v1431 = vadd.f32 %v1403, 1.0
    %v1432 = vlog2.pop %v1431
    %v1433 = vmul.f32 %v1432, 0.6931472
    %v1434 = vmul.f32 -0.5, %v1403
    %v1435 = vadd.f32 %v1434, 1.0
    %v1436 = vmul.f32 %v1435, %v1403
    %v1437 = vand.u32 2147483647, %v1403
    %vm1438 = vcmp.lt.f32.partialorder %v1437, 0.0004427343
    %v1439 = vsel %vm1438, %v1436, %v1433
    %v1444 = vlaneseq
    %v1445 = vshrl.u32 %v1444, 7
    %v1446 = vsub.s32 %v585, %v1445
    %v1447 = vrot.slane %v1412, %v1446
    %v1448 = vlaneseq
    %v1449 = vshrl.u32 %v1448, 7
    %v1450 = vsub.s32 %v585, %v1449
    %v1451 = vrot.slane %v1421, %v1450
    %v1452 = vlaneseq
    %v1453 = vshrl.u32 %v1452, 7
    %v1454 = vsub.s32 %v585, %v1453
    %v1455 = vrot.slane %v1430, %v1454
    %v1456 = vlaneseq
    %v1457 = vshrl.u32 %v1456, 7
    %v1458 = vsub.s32 %v585, %v1457
    %v1459 = vrot.slane %v1439, %v1458
    %v1460 = vsel %vm602, %v1451, %v1447
    %v1461 = vsel %vm604, %v1455, %v1460
    %v1462 = vsel %vm606, %v1459, %v1461
    %v1464 = vsel %vm609, %v1462, 0.0
    %1465 = vadd.xlane.f32.xlu0 %v1464
    %v1466 = vpop.xlane.xlu0 %1465
    %v1467 = vmul.f32 %v1377, %v488
    %v1468 = vmul.f32 %v1379, %v490
    %v1469 = vmul.f32 %v1381, %v492
    %v1470 = vmul.f32 %v1383, %v494
    %v1471 = vmul.f32 %v1467, 7.389056
    %v1472 = vmul.f32 %v1468, 7.389056
    %v1473 = vmul.f32 %v1469, 7.389056
    %v1474 = vmul.f32 %v1470, 7.389056
    %v1475 = vsel %vm531, %v1471, 0.0
    %1476 = vadd.xlane.f32.xlu0 %v1475
    %v1477 = vpop.xlane.xlu0 %1476
    %v1478 = vsel %vm531, %v1472, 0.0
    %1479 = vadd.xlane.f32.xlu0 %v1478
    %v1480 = vpop.xlane.xlu0 %1479
    %v1481 = vsel %vm531, %v1473, 0.0
    %1482 = vadd.xlane.f32.xlu0 %v1481
    %v1483 = vpop.xlane.xlu0 %1482
    %v1484 = vsel %vm531, %v1474, 0.0
    %1485 = vadd.xlane.f32.xlu0 %v1484
    %v1486 = vpop.xlane.xlu0 %1485
    %v1487 = vadd.f32 %v1477, 1.0
    %v1488 = vlog2.pop %v1487
    %v1489 = vmul.f32 %v1488, 0.6931472
    %v1490 = vmul.f32 -0.5, %v1477
    %v1491 = vadd.f32 %v1490, 1.0
    %v1492 = vmul.f32 %v1491, %v1477
    %v1493 = vand.u32 2147483647, %v1477
    %vm1494 = vcmp.lt.f32.partialorder %v1493, 0.0004427343
    %v1495 = vsel %vm1494, %v1492, %v1489
    %v1496 = vadd.f32 %v1480, 1.0
    %v1497 = vlog2.pop %v1496
    %v1498 = vmul.f32 %v1497, 0.6931472
    %v1499 = vmul.f32 -0.5, %v1480
    %v1500 = vadd.f32 %v1499, 1.0
    %v1501 = vmul.f32 %v1500, %v1480
    %v1502 = vand.u32 2147483647, %v1480
    %vm1503 = vcmp.lt.f32.partialorder %v1502, 0.0004427343
    %v1504 = vsel %vm1503, %v1501, %v1498
    %v1505 = vadd.f32 %v1483, 1.0
    %v1506 = vlog2.pop %v1505
    %v1507 = vmul.f32 %v1506, 0.6931472
    %v1508 = vmul.f32 -0.5, %v1483
    %v1509 = vadd.f32 %v1508, 1.0
    %v1510 = vmul.f32 %v1509, %v1483
    %v1511 = vand.u32 2147483647, %v1483
    %vm1512 = vcmp.lt.f32.partialorder %v1511, 0.0004427343
    %v1513 = vsel %vm1512, %v1510, %v1507
    %v1514 = vadd.f32 %v1486, 1.0
    %v1515 = vlog2.pop %v1514
    %v1516 = vmul.f32 %v1515, 0.6931472
    %v1517 = vmul.f32 -0.5, %v1486
    %v1518 = vadd.f32 %v1517, 1.0
    %v1519 = vmul.f32 %v1518, %v1486
    %v1520 = vand.u32 2147483647, %v1486
    %vm1521 = vcmp.lt.f32.partialorder %v1520, 0.0004427343
    %v1522 = vsel %vm1521, %v1519, %v1516
    %v1527 = vlaneseq
    %v1528 = vshrl.u32 %v1527, 7
    %v1529 = vsub.s32 %v585, %v1528
    %v1530 = vrot.slane %v1495, %v1529
    %v1531 = vlaneseq
    %v1532 = vshrl.u32 %v1531, 7
    %v1533 = vsub.s32 %v585, %v1532
    %v1534 = vrot.slane %v1504, %v1533
    %v1535 = vlaneseq
    %v1536 = vshrl.u32 %v1535, 7
    %v1537 = vsub.s32 %v585, %v1536
    %v1538 = vrot.slane %v1513, %v1537
    %v1539 = vlaneseq
    %v1540 = vshrl.u32 %v1539, 7
    %v1541 = vsub.s32 %v585, %v1540
    %v1542 = vrot.slane %v1522, %v1541
    %v1543 = vsel %vm602, %v1534, %v1530
    %v1544 = vsel %vm604, %v1538, %v1543
    %v1545 = vsel %vm606, %v1542, %v1544
    %v1547 = vsel %vm609, %v1545, 0.0
    %1548 = vadd.xlane.f32.xlu0 %v1547
    %v1549 = vpop.xlane.xlu0 %1548
    %v1550 = vsel %vm531, %v1377, 0.0
    %1551 = vadd.xlane.f32.xlu0 %v1550
    %v1552 = vpop.xlane.xlu0 %1551
    %v1553 = vsel %vm531, %v1379, 0.0
    %1554 = vadd.xlane.f32.xlu0 %v1553
    %v1555 = vpop.xlane.xlu0 %1554
    %v1556 = vsel %vm531, %v1381, 0.0
    %1557 = vadd.xlane.f32.xlu0 %v1556
    %v1558 = vpop.xlane.xlu0 %1557
    %v1559 = vsel %vm531, %v1383, 0.0
    %1560 = vadd.xlane.f32.xlu0 %v1559
    %v1561 = vpop.xlane.xlu0 %1560
    %v1562 = vadd.f32 %v1552, 1.0
    %v1563 = vlog2.pop %v1562
    %v1564 = vmul.f32 %v1563, 0.6931472
    %v1565 = vmul.f32 -0.5, %v1552
    %v1566 = vadd.f32 %v1565, 1.0
    %v1567 = vmul.f32 %v1566, %v1552
    %v1568 = vand.u32 2147483647, %v1552
    %vm1569 = vcmp.lt.f32.partialorder %v1568, 0.0004427343
    %v1570 = vsel %vm1569, %v1567, %v1564
    %v1571 = vadd.f32 %v1555, 1.0
    %v1572 = vlog2.pop %v1571
    %v1573 = vmul.f32 %v1572, 0.6931472
    %v1574 = vmul.f32 -0.5, %v1555
    %v1575 = vadd.f32 %v1574, 1.0
    %v1576 = vmul.f32 %v1575, %v1555
    %v1577 = vand.u32 2147483647, %v1555
    %vm1578 = vcmp.lt.f32.partialorder %v1577, 0.0004427343
    %v1579 = vsel %vm1578, %v1576, %v1573
    %v1580 = vadd.f32 %v1558, 1.0
    %v1581 = vlog2.pop %v1580
    %v1582 = vmul.f32 %v1581, 0.6931472
    %v1583 = vmul.f32 -0.5, %v1558
    %v1584 = vadd.f32 %v1583, 1.0
    %v1585 = vmul.f32 %v1584, %v1558
    %v1586 = vand.u32 2147483647, %v1558
    %vm1587 = vcmp.lt.f32.partialorder %v1586, 0.0004427343
    %v1588 = vsel %vm1587, %v1585, %v1582
    %v1589 = vadd.f32 %v1561, 1.0
    %v1590 = vlog2.pop %v1589
    %v1591 = vmul.f32 %v1590, 0.6931472
    %v1592 = vmul.f32 -0.5, %v1561
    %v1593 = vadd.f32 %v1592, 1.0
    %v1594 = vmul.f32 %v1593, %v1561
    %v1595 = vand.u32 2147483647, %v1561
    %vm1596 = vcmp.lt.f32.partialorder %v1595, 0.0004427343
    %v1597 = vsel %vm1596, %v1594, %v1591
    %v1602 = vlaneseq
    %v1603 = vshrl.u32 %v1602, 7
    %v1604 = vsub.s32 %v585, %v1603
    %v1605 = vrot.slane %v1570, %v1604
    %v1606 = vlaneseq
    %v1607 = vshrl.u32 %v1606, 7
    %v1608 = vsub.s32 %v585, %v1607
    %v1609 = vrot.slane %v1579, %v1608
    %v1610 = vlaneseq
    %v1611 = vshrl.u32 %v1610, 7
    %v1612 = vsub.s32 %v585, %v1611
    %v1613 = vrot.slane %v1588, %v1612
    %v1614 = vlaneseq
    %v1615 = vshrl.u32 %v1614, 7
    %v1616 = vsub.s32 %v585, %v1615
    %v1617 = vrot.slane %v1597, %v1616
    %v1618 = vsel %vm602, %v1609, %v1605
    %v1619 = vsel %vm604, %v1613, %v1618
    %v1620 = vsel %vm606, %v1617, %v1619
    %v1622 = vsel %vm609, %v1620, 0.0
    %1623 = vadd.xlane.f32.xlu0 %v1622
    %v1624 = vpop.xlane.xlu0 %1623
    %v1625 = vmul.f32 %v1377, %v476
    %v1626 = vmul.f32 %v1379, %v478
    %v1627 = vmul.f32 %v1381, %v480
    %v1628 = vmul.f32 %v1383, %v482
    %v1629 = vmul.f32 %v1625, 0.049787067
    %v1630 = vmul.f32 %v1626, 0.049787067
    %v1631 = vmul.f32 %v1627, 0.049787067
    %v1632 = vmul.f32 %v1628, 0.049787067
    %v1633 = vsel %vm531, %v1629, 0.0
    %1634 = vadd.xlane.f32.xlu0 %v1633
    %v1635 = vpop.xlane.xlu0 %1634
    %v1636 = vsel %vm531, %v1630, 0.0
    %1637 = vadd.xlane.f32.xlu0 %v1636
    %v1638 = vpop.xlane.xlu0 %1637
    %v1639 = vsel %vm531, %v1631, 0.0
    %1640 = vadd.xlane.f32.xlu0 %v1639
    %v1641 = vpop.xlane.xlu0 %1640
    %v1642 = vsel %vm531, %v1632, 0.0
    %1643 = vadd.xlane.f32.xlu0 %v1642
    %v1644 = vpop.xlane.xlu0 %1643
    %v1645 = vadd.f32 %v1635, 1.0
    %v1646 = vlog2.pop %v1645
    %v1647 = vmul.f32 %v1646, 0.6931472
    %v1648 = vmul.f32 -0.5, %v1635
    %v1649 = vadd.f32 %v1648, 1.0
    %v1650 = vmul.f32 %v1649, %v1635
    %v1651 = vand.u32 2147483647, %v1635
    %vm1652 = vcmp.lt.f32.partialorder %v1651, 0.0004427343
    %v1653 = vsel %vm1652, %v1650, %v1647
    %v1654 = vadd.f32 %v1638, 1.0
    %v1655 = vlog2.pop %v1654
    %v1656 = vmul.f32 %v1655, 0.6931472
    %v1657 = vmul.f32 -0.5, %v1638
    %v1658 = vadd.f32 %v1657, 1.0
    %v1659 = vmul.f32 %v1658, %v1638
    %v1660 = vand.u32 2147483647, %v1638
    %vm1661 = vcmp.lt.f32.partialorder %v1660, 0.0004427343
    %v1662 = vsel %vm1661, %v1659, %v1656
    %v1663 = vadd.f32 %v1641, 1.0
    %v1664 = vlog2.pop %v1663
    %v1665 = vmul.f32 %v1664, 0.6931472
    %v1666 = vmul.f32 -0.5, %v1641
    %v1667 = vadd.f32 %v1666, 1.0
    %v1668 = vmul.f32 %v1667, %v1641
    %v1669 = vand.u32 2147483647, %v1641
    %vm1670 = vcmp.lt.f32.partialorder %v1669, 0.0004427343
    %v1671 = vsel %vm1670, %v1668, %v1665
    %v1672 = vadd.f32 %v1644, 1.0
    %v1673 = vlog2.pop %v1672
    %v1674 = vmul.f32 %v1673, 0.6931472
    %v1675 = vmul.f32 -0.5, %v1644
    %v1676 = vadd.f32 %v1675, 1.0
    %v1677 = vmul.f32 %v1676, %v1644
    %v1678 = vand.u32 2147483647, %v1644
    %vm1679 = vcmp.lt.f32.partialorder %v1678, 0.0004427343
    %v1680 = vsel %vm1679, %v1677, %v1674
    %v1685 = vlaneseq
    %v1686 = vshrl.u32 %v1685, 7
    %v1687 = vsub.s32 %v585, %v1686
    %v1688 = vrot.slane %v1653, %v1687
    %v1689 = vlaneseq
    %v1690 = vshrl.u32 %v1689, 7
    %v1691 = vsub.s32 %v585, %v1690
    %v1692 = vrot.slane %v1662, %v1691
    %v1693 = vlaneseq
    %v1694 = vshrl.u32 %v1693, 7
    %v1695 = vsub.s32 %v585, %v1694
    %v1696 = vrot.slane %v1671, %v1695
    %v1697 = vlaneseq
    %v1698 = vshrl.u32 %v1697, 7
    %v1699 = vsub.s32 %v585, %v1698
    %v1700 = vrot.slane %v1680, %v1699
    %v1701 = vsel %vm602, %v1692, %v1688
    %v1702 = vsel %vm604, %v1696, %v1701
    %v1703 = vsel %vm606, %v1700, %v1702
    %v1705 = vsel %vm609, %v1703, 0.0
    %1706 = vadd.xlane.f32.xlu0 %v1705
    %v1707 = vpop.xlane.xlu0 %1706
    %v1708 = vmul.f32 %v1377, %v495
    %v1709 = vmul.f32 %v1379, %v496
    %v1710 = vmul.f32 %v1381, %v497
    %v1711 = vmul.f32 %v1383, %v498
    %v1712 = vmul.f32 %v1708, 0.000911882
    %v1713 = vmul.f32 %v1709, 0.000911882
    %v1714 = vmul.f32 %v1710, 0.000911882
    %v1715 = vmul.f32 %v1711, 0.000911882
    %v1716 = vsel %vm531, %v1712, 0.0
    %1717 = vadd.xlane.f32.xlu0 %v1716
    %v1718 = vpop.xlane.xlu0 %1717
    %v1719 = vsel %vm531, %v1713, 0.0
    %1720 = vadd.xlane.f32.xlu0 %v1719
    %v1721 = vpop.xlane.xlu0 %1720
    %v1722 = vsel %vm531, %v1714, 0.0
    %1723 = vadd.xlane.f32.xlu0 %v1722
    %v1724 = vpop.xlane.xlu0 %1723
    %v1725 = vsel %vm531, %v1715, 0.0
    %1726 = vadd.xlane.f32.xlu0 %v1725
    %v1727 = vpop.xlane.xlu0 %1726
    %v1728 = vadd.f32 %v1718, 1.0
    %v1729 = vlog2.pop %v1728
    %v1730 = vmul.f32 %v1729, 0.6931472
    %v1731 = vmul.f32 -0.5, %v1718
    %v1732 = vadd.f32 %v1731, 1.0
    %v1733 = vmul.f32 %v1732, %v1718
    %v1734 = vand.u32 2147483647, %v1718
    %vm1735 = vcmp.lt.f32.partialorder %v1734, 0.0004427343
    %v1736 = vsel %vm1735, %v1733, %v1730
    %v1737 = vadd.f32 %v1721, 1.0
    %v1738 = vlog2.pop %v1737
    %v1739 = vmul.f32 %v1738, 0.6931472
    %v1740 = vmul.f32 -0.5, %v1721
    %v1741 = vadd.f32 %v1740, 1.0
    %v1742 = vmul.f32 %v1741, %v1721
    %v1743 = vand.u32 2147483647, %v1721
    %vm1744 = vcmp.lt.f32.partialorder %v1743, 0.0004427343
    %v1745 = vsel %vm1744, %v1742, %v1739
    %v1746 = vadd.f32 %v1724, 1.0
    %v1747 = vlog2.pop %v1746
    %v1748 = vmul.f32 %v1747, 0.6931472
    %v1749 = vmul.f32 -0.5, %v1724
    %v1750 = vadd.f32 %v1749, 1.0
    %v1751 = vmul.f32 %v1750, %v1724
    %v1752 = vand.u32 2147483647, %v1724
    %vm1753 = vcmp.lt.f32.partialorder %v1752, 0.0004427343
    %v1754 = vsel %vm1753, %v1751, %v1748
    %v1755 = vadd.f32 %v1727, 1.0
    %v1756 = vlog2.pop %v1755
    %v1757 = vmul.f32 %v1756, 0.6931472
    %v1758 = vmul.f32 -0.5, %v1727
    %v1759 = vadd.f32 %v1758, 1.0
    %v1760 = vmul.f32 %v1759, %v1727
    %v1761 = vand.u32 2147483647, %v1727
    %vm1762 = vcmp.lt.f32.partialorder %v1761, 0.0004427343
    %v1763 = vsel %vm1762, %v1760, %v1757
    %v1768 = vlaneseq
    %v1769 = vshrl.u32 %v1768, 7
    %v1770 = vsub.s32 %v585, %v1769
    %v1771 = vrot.slane %v1736, %v1770
    %v1772 = vlaneseq
    %v1773 = vshrl.u32 %v1772, 7
    %v1774 = vsub.s32 %v585, %v1773
    %v1775 = vrot.slane %v1745, %v1774
    %v1776 = vlaneseq
    %v1777 = vshrl.u32 %v1776, 7
    %v1778 = vsub.s32 %v585, %v1777
    %v1779 = vrot.slane %v1754, %v1778
    %v1780 = vlaneseq
    %v1781 = vshrl.u32 %v1780, 7
    %v1782 = vsub.s32 %v585, %v1781
    %v1783 = vrot.slane %v1763, %v1782
    %v1784 = vsel %vm602, %v1775, %v1771
    %v1785 = vsel %vm604, %v1779, %v1784
    %v1786 = vsel %vm606, %v1783, %v1785
    %v1788 = vsel %vm609, %v1786, 0.0
    %1789 = vadd.xlane.f32.xlu0 %v1788
    %v1790 = vpop.xlane.xlu0 %1789
    %v1791 = vsub.f32 %v231, 0.75
    %v1792 = vsub.f32 %v310, 0.75
    %v1793 = vsub.f32 %v389, 0.75
    %v1794 = vsub.f32 %v468, 0.75
    %v1795 = vmul.f32 %v1791, %v1791
    %v1796 = vmul.f32 %v1792, %v1792
    %v1797 = vmul.f32 %v1793, %v1793
    %v1798 = vmul.f32 %v1794, %v1794
    %v1799 = vmul.f32 %v1795, -50.0
    %v1800 = vmul.f32 %v1796, -50.0
    %v1801 = vmul.f32 %v1797, -50.0
    %v1802 = vmul.f32 %v1798, -50.0
    %v1803 = vmul.f32 %v1799, 1.442695
    %v1804 = vpow.pop %v1803
    %v1805 = vmul.f32 %v1800, 1.442695
    %v1806 = vpow.pop %v1805
    %v1807 = vmul.f32 %v1801, 1.442695
    %v1808 = vpow.pop %v1807
    %v1809 = vmul.f32 %v1802, 1.442695
    %v1810 = vpow.pop %v1809
    %v1811 = vmul.f32 %v1804, %v499
    %v1812 = vmul.f32 %v1806, %v500
    %v1813 = vmul.f32 %v1808, %v501
    %v1814 = vmul.f32 %v1810, %v502
    %v1815 = vmul.f32 %v1811, 442413.4
    %v1816 = vmul.f32 %v1812, 442413.4
    %v1817 = vmul.f32 %v1813, 442413.4
    %v1818 = vmul.f32 %v1814, 442413.4
    %v1819 = vsel %vm531, %v1815, 0.0
    %1820 = vadd.xlane.f32.xlu0 %v1819
    %v1821 = vpop.xlane.xlu0 %1820
    %v1822 = vsel %vm531, %v1816, 0.0
    %1823 = vadd.xlane.f32.xlu0 %v1822
    %v1824 = vpop.xlane.xlu0 %1823
    %v1825 = vsel %vm531, %v1817, 0.0
    %1826 = vadd.xlane.f32.xlu0 %v1825
    %v1827 = vpop.xlane.xlu0 %1826
    %v1828 = vsel %vm531, %v1818, 0.0
    %1829 = vadd.xlane.f32.xlu0 %v1828
    %v1830 = vpop.xlane.xlu0 %1829
    %v1831 = vadd.f32 %v1821, 1.0
    %v1832 = vlog2.pop %v1831
    %v1833 = vmul.f32 %v1832, 0.6931472
    %v1834 = vmul.f32 -0.5, %v1821
    %v1835 = vadd.f32 %v1834, 1.0
    %v1836 = vmul.f32 %v1835, %v1821
    %v1837 = vand.u32 2147483647, %v1821
    %vm1838 = vcmp.lt.f32.partialorder %v1837, 0.0004427343
    %v1839 = vsel %vm1838, %v1836, %v1833
    %v1840 = vadd.f32 %v1824, 1.0
    %v1841 = vlog2.pop %v1840
    %v1842 = vmul.f32 %v1841, 0.6931472
    %v1843 = vmul.f32 -0.5, %v1824
    %v1844 = vadd.f32 %v1843, 1.0
    %v1845 = vmul.f32 %v1844, %v1824
    %v1846 = vand.u32 2147483647, %v1824
    %vm1847 = vcmp.lt.f32.partialorder %v1846, 0.0004427343
    %v1848 = vsel %vm1847, %v1845, %v1842
    %v1849 = vadd.f32 %v1827, 1.0
    %v1850 = vlog2.pop %v1849
    %v1851 = vmul.f32 %v1850, 0.6931472
    %v1852 = vmul.f32 -0.5, %v1827
    %v1853 = vadd.f32 %v1852, 1.0
    %v1854 = vmul.f32 %v1853, %v1827
    %v1855 = vand.u32 2147483647, %v1827
    %vm1856 = vcmp.lt.f32.partialorder %v1855, 0.0004427343
    %v1857 = vsel %vm1856, %v1854, %v1851
    %v1858 = vadd.f32 %v1830, 1.0
    %v1859 = vlog2.pop %v1858
    %v1860 = vmul.f32 %v1859, 0.6931472
    %v1861 = vmul.f32 -0.5, %v1830
    %v1862 = vadd.f32 %v1861, 1.0
    %v1863 = vmul.f32 %v1862, %v1830
    %v1864 = vand.u32 2147483647, %v1830
    %vm1865 = vcmp.lt.f32.partialorder %v1864, 0.0004427343
    %v1866 = vsel %vm1865, %v1863, %v1860
    %v1871 = vlaneseq
    %v1872 = vshrl.u32 %v1871, 7
    %v1873 = vsub.s32 %v585, %v1872
    %v1874 = vrot.slane %v1839, %v1873
    %v1875 = vlaneseq
    %v1876 = vshrl.u32 %v1875, 7
    %v1877 = vsub.s32 %v585, %v1876
    %v1878 = vrot.slane %v1848, %v1877
    %v1879 = vlaneseq
    %v1880 = vshrl.u32 %v1879, 7
    %v1881 = vsub.s32 %v585, %v1880
    %v1882 = vrot.slane %v1857, %v1881
    %v1883 = vlaneseq
    %v1884 = vshrl.u32 %v1883, 7
    %v1885 = vsub.s32 %v585, %v1884
    %v1886 = vrot.slane %v1866, %v1885
    %v1887 = vsel %vm602, %v1878, %v1874
    %v1888 = vsel %vm604, %v1882, %v1887
    %v1889 = vsel %vm606, %v1886, %v1888
    %v1891 = vsel %vm609, %v1889, 0.0
    %1892 = vadd.xlane.f32.xlu0 %v1891
    %v1893 = vpop.xlane.xlu0 %1892
    %v1894 = vmul.f32 %v1804, %v488
    %v1895 = vmul.f32 %v1806, %v490
    %v1896 = vmul.f32 %v1808, %v492
    %v1897 = vmul.f32 %v1810, %v494
    %v1898 = vmul.f32 %v1894, 1096.6332
    %v1899 = vmul.f32 %v1895, 1096.6332
    %v1900 = vmul.f32 %v1896, 1096.6332
    %v1901 = vmul.f32 %v1897, 1096.6332
    %v1902 = vsel %vm531, %v1898, 0.0
    %1903 = vadd.xlane.f32.xlu0 %v1902
    %v1904 = vpop.xlane.xlu0 %1903
    %v1905 = vsel %vm531, %v1899, 0.0
    %1906 = vadd.xlane.f32.xlu0 %v1905
    %v1907 = vpop.xlane.xlu0 %1906
    %v1908 = vsel %vm531, %v1900, 0.0
    %1909 = vadd.xlane.f32.xlu0 %v1908
    %v1910 = vpop.xlane.xlu0 %1909
    %v1911 = vsel %vm531, %v1901, 0.0
    %1912 = vadd.xlane.f32.xlu0 %v1911
    %v1913 = vpop.xlane.xlu0 %1912
    %v1914 = vadd.f32 %v1904, 1.0
    %v1915 = vlog2.pop %v1914
    %v1916 = vmul.f32 %v1915, 0.6931472
    %v1917 = vmul.f32 -0.5, %v1904
    %v1918 = vadd.f32 %v1917, 1.0
    %v1919 = vmul.f32 %v1918, %v1904
    %v1920 = vand.u32 2147483647, %v1904
    %vm1921 = vcmp.lt.f32.partialorder %v1920, 0.0004427343
    %v1922 = vsel %vm1921, %v1919, %v1916
    %v1923 = vadd.f32 %v1907, 1.0
    %v1924 = vlog2.pop %v1923
    %v1925 = vmul.f32 %v1924, 0.6931472
    %v1926 = vmul.f32 -0.5, %v1907
    %v1927 = vadd.f32 %v1926, 1.0
    %v1928 = vmul.f32 %v1927, %v1907
    %v1929 = vand.u32 2147483647, %v1907
    %vm1930 = vcmp.lt.f32.partialorder %v1929, 0.0004427343
    %v1931 = vsel %vm1930, %v1928, %v1925
    %v1932 = vadd.f32 %v1910, 1.0
    %v1933 = vlog2.pop %v1932
    %v1934 = vmul.f32 %v1933, 0.6931472
    %v1935 = vmul.f32 -0.5, %v1910
    %v1936 = vadd.f32 %v1935, 1.0
    %v1937 = vmul.f32 %v1936, %v1910
    %v1938 = vand.u32 2147483647, %v1910
    %vm1939 = vcmp.lt.f32.partialorder %v1938, 0.0004427343
    %v1940 = vsel %vm1939, %v1937, %v1934
    %v1941 = vadd.f32 %v1913, 1.0
    %v1942 = vlog2.pop %v1941
    %v1943 = vmul.f32 %v1942, 0.6931472
    %v1944 = vmul.f32 -0.5, %v1913
    %v1945 = vadd.f32 %v1944, 1.0
    %v1946 = vmul.f32 %v1945, %v1913
    %v1947 = vand.u32 2147483647, %v1913
    %vm1948 = vcmp.lt.f32.partialorder %v1947, 0.0004427343
    %v1949 = vsel %vm1948, %v1946, %v1943
    %v1954 = vlaneseq
    %v1955 = vshrl.u32 %v1954, 7
    %v1956 = vsub.s32 %v585, %v1955
    %v1957 = vrot.slane %v1922, %v1956
    %v1958 = vlaneseq
    %v1959 = vshrl.u32 %v1958, 7
    %v1960 = vsub.s32 %v585, %v1959
    %v1961 = vrot.slane %v1931, %v1960
    %v1962 = vlaneseq
    %v1963 = vshrl.u32 %v1962, 7
    %v1964 = vsub.s32 %v585, %v1963
    %v1965 = vrot.slane %v1940, %v1964
    %v1966 = vlaneseq
    %v1967 = vshrl.u32 %v1966, 7
    %v1968 = vsub.s32 %v585, %v1967
    %v1969 = vrot.slane %v1949, %v1968
    %v1970 = vsel %vm602, %v1961, %v1957
    %v1971 = vsel %vm604, %v1965, %v1970
    %v1972 = vsel %vm606, %v1969, %v1971
    %v1974 = vsel %vm609, %v1972, 0.0
    %1975 = vadd.xlane.f32.xlu0 %v1974
    %v1976 = vpop.xlane.xlu0 %1975
    %v1977 = vsel %vm531, %v1804, 0.0
    %1978 = vadd.xlane.f32.xlu0 %v1977
    %v1979 = vpop.xlane.xlu0 %1978
    %v1980 = vsel %vm531, %v1806, 0.0
    %1981 = vadd.xlane.f32.xlu0 %v1980
    %v1982 = vpop.xlane.xlu0 %1981
    %v1983 = vsel %vm531, %v1808, 0.0
    %1984 = vadd.xlane.f32.xlu0 %v1983
    %v1985 = vpop.xlane.xlu0 %1984
    %v1986 = vsel %vm531, %v1810, 0.0
    %1987 = vadd.xlane.f32.xlu0 %v1986
    %v1988 = vpop.xlane.xlu0 %1987
    %v1989 = vadd.f32 %v1979, 1.0
    %v1990 = vlog2.pop %v1989
    %v1991 = vmul.f32 %v1990, 0.6931472
    %v1992 = vmul.f32 -0.5, %v1979
    %v1993 = vadd.f32 %v1992, 1.0
    %v1994 = vmul.f32 %v1993, %v1979
    %v1995 = vand.u32 2147483647, %v1979
    %vm1996 = vcmp.lt.f32.partialorder %v1995, 0.0004427343
    %v1997 = vsel %vm1996, %v1994, %v1991
    %v1998 = vadd.f32 %v1982, 1.0
    %v1999 = vlog2.pop %v1998
    %v2000 = vmul.f32 %v1999, 0.6931472
    %v2001 = vmul.f32 -0.5, %v1982
    %v2002 = vadd.f32 %v2001, 1.0
    %v2003 = vmul.f32 %v2002, %v1982
    %v2004 = vand.u32 2147483647, %v1982
    %vm2005 = vcmp.lt.f32.partialorder %v2004, 0.0004427343
    %v2006 = vsel %vm2005, %v2003, %v2000
    %v2007 = vadd.f32 %v1985, 1.0
    %v2008 = vlog2.pop %v2007
    %v2009 = vmul.f32 %v2008, 0.6931472
    %v2010 = vmul.f32 -0.5, %v1985
    %v2011 = vadd.f32 %v2010, 1.0
    %v2012 = vmul.f32 %v2011, %v1985
    %v2013 = vand.u32 2147483647, %v1985
    %vm2014 = vcmp.lt.f32.partialorder %v2013, 0.0004427343
    %v2015 = vsel %vm2014, %v2012, %v2009
    %v2016 = vadd.f32 %v1988, 1.0
    %v2017 = vlog2.pop %v2016
    %v2018 = vmul.f32 %v2017, 0.6931472
    %v2019 = vmul.f32 -0.5, %v1988
    %v2020 = vadd.f32 %v2019, 1.0
    %v2021 = vmul.f32 %v2020, %v1988
    %v2022 = vand.u32 2147483647, %v1988
    %vm2023 = vcmp.lt.f32.partialorder %v2022, 0.0004427343
    %v2024 = vsel %vm2023, %v2021, %v2018
    %v2029 = vlaneseq
    %v2030 = vshrl.u32 %v2029, 7
    %v2031 = vsub.s32 %v585, %v2030
    %v2032 = vrot.slane %v1997, %v2031
    %v2033 = vlaneseq
    %v2034 = vshrl.u32 %v2033, 7
    %v2035 = vsub.s32 %v585, %v2034
    %v2036 = vrot.slane %v2006, %v2035
    %v2037 = vlaneseq
    %v2038 = vshrl.u32 %v2037, 7
    %v2039 = vsub.s32 %v585, %v2038
    %v2040 = vrot.slane %v2015, %v2039
    %v2041 = vlaneseq
    %v2042 = vshrl.u32 %v2041, 7
    %v2043 = vsub.s32 %v585, %v2042
    %v2044 = vrot.slane %v2024, %v2043
    %v2045 = vsel %vm602, %v2036, %v2032
    %v2046 = vsel %vm604, %v2040, %v2045
    %v2047 = vsel %vm606, %v2044, %v2046
    %v2049 = vsel %vm609, %v2047, 0.0
    %2050 = vadd.xlane.f32.xlu0 %v2049
    %v2051 = vpop.xlane.xlu0 %2050
    %v2052 = vmul.f32 %v1804, %v476
    %v2053 = vmul.f32 %v1806, %v478
    %v2054 = vmul.f32 %v1808, %v480
    %v2055 = vmul.f32 %v1810, %v482
    %v2056 = vmul.f32 %v2052, 0.00033546262
    %v2057 = vmul.f32 %v2053, 0.00033546262
    %v2058 = vmul.f32 %v2054, 0.00033546262
    %v2059 = vmul.f32 %v2055, 0.00033546262
    %v2060 = vsel %vm531, %v2056, 0.0
    %2061 = vadd.xlane.f32.xlu0 %v2060
    %v2062 = vpop.xlane.xlu0 %2061
    %v2063 = vsel %vm531, %v2057, 0.0
    %2064 = vadd.xlane.f32.xlu0 %v2063
    %v2065 = vpop.xlane.xlu0 %2064
    %v2066 = vsel %vm531, %v2058, 0.0
    %2067 = vadd.xlane.f32.xlu0 %v2066
    %v2068 = vpop.xlane.xlu0 %2067
    %v2069 = vsel %vm531, %v2059, 0.0
    %2070 = vadd.xlane.f32.xlu0 %v2069
    %v2071 = vpop.xlane.xlu0 %2070
    %v2072 = vadd.f32 %v2062, 1.0
    %v2073 = vlog2.pop %v2072
    %v2074 = vmul.f32 %v2073, 0.6931472
    %v2075 = vmul.f32 -0.5, %v2062
    %v2076 = vadd.f32 %v2075, 1.0
    %v2077 = vmul.f32 %v2076, %v2062
    %v2078 = vand.u32 2147483647, %v2062
    %vm2079 = vcmp.lt.f32.partialorder %v2078, 0.0004427343
    %v2080 = vsel %vm2079, %v2077, %v2074
    %v2081 = vadd.f32 %v2065, 1.0
    %v2082 = vlog2.pop %v2081
    %v2083 = vmul.f32 %v2082, 0.6931472
    %v2084 = vmul.f32 -0.5, %v2065
    %v2085 = vadd.f32 %v2084, 1.0
    %v2086 = vmul.f32 %v2085, %v2065
    %v2087 = vand.u32 2147483647, %v2065
    %vm2088 = vcmp.lt.f32.partialorder %v2087, 0.0004427343
    %v2089 = vsel %vm2088, %v2086, %v2083
    %v2090 = vadd.f32 %v2068, 1.0
    %v2091 = vlog2.pop %v2090
    %v2092 = vmul.f32 %v2091, 0.6931472
    %v2093 = vmul.f32 -0.5, %v2068
    %v2094 = vadd.f32 %v2093, 1.0
    %v2095 = vmul.f32 %v2094, %v2068
    %v2096 = vand.u32 2147483647, %v2068
    %vm2097 = vcmp.lt.f32.partialorder %v2096, 0.0004427343
    %v2098 = vsel %vm2097, %v2095, %v2092
    %v2099 = vadd.f32 %v2071, 1.0
    %v2100 = vlog2.pop %v2099
    %v2101 = vmul.f32 %v2100, 0.6931472
    %v2102 = vmul.f32 -0.5, %v2071
    %v2103 = vadd.f32 %v2102, 1.0
    %v2104 = vmul.f32 %v2103, %v2071
    %v2105 = vand.u32 2147483647, %v2071
    %vm2106 = vcmp.lt.f32.partialorder %v2105, 0.0004427343
    %v2107 = vsel %vm2106, %v2104, %v2101
    %v2112 = vlaneseq
    %v2113 = vshrl.u32 %v2112, 7
    %v2114 = vsub.s32 %v585, %v2113
    %v2115 = vrot.slane %v2080, %v2114
    %v2116 = vlaneseq
    %v2117 = vshrl.u32 %v2116, 7
    %v2118 = vsub.s32 %v585, %v2117
    %v2119 = vrot.slane %v2089, %v2118
    %v2120 = vlaneseq
    %v2121 = vshrl.u32 %v2120, 7
    %v2122 = vsub.s32 %v585, %v2121
    %v2123 = vrot.slane %v2098, %v2122
    %v2124 = vlaneseq
    %v2125 = vshrl.u32 %v2124, 7
    %v2126 = vsub.s32 %v585, %v2125
    %v2127 = vrot.slane %v2107, %v2126
    %v2128 = vsel %vm602, %v2119, %v2115
    %v2129 = vsel %vm604, %v2123, %v2128
    %v2130 = vsel %vm606, %v2127, %v2129
    %v2132 = vsel %vm609, %v2130, 0.0
    %2133 = vadd.xlane.f32.xlu0 %v2132
    %v2134 = vpop.xlane.xlu0 %2133
    %v2135 = vmul.f32 %v1804, %v495
    %v2136 = vmul.f32 %v1806, %v496
    %v2137 = vmul.f32 %v1808, %v497
    %v2138 = vmul.f32 %v1810, %v498
    %v2139 = vmul.f32 %v2135, 4.1399378e-08
    %v2140 = vmul.f32 %v2136, 4.1399378e-08
    %v2141 = vmul.f32 %v2137, 4.1399378e-08
    %v2142 = vmul.f32 %v2138, 4.1399378e-08
    %v2143 = vsel %vm531, %v2139, 0.0
    %2144 = vadd.xlane.f32.xlu0 %v2143
    %v2145 = vpop.xlane.xlu0 %2144
    %v2146 = vsel %vm531, %v2140, 0.0
    %2147 = vadd.xlane.f32.xlu0 %v2146
    %v2148 = vpop.xlane.xlu0 %2147
    %v2149 = vsel %vm531, %v2141, 0.0
    %2150 = vadd.xlane.f32.xlu0 %v2149
    %v2151 = vpop.xlane.xlu0 %2150
    %v2152 = vsel %vm531, %v2142, 0.0
    %2153 = vadd.xlane.f32.xlu0 %v2152
    %v2154 = vpop.xlane.xlu0 %2153
    %v2155 = vadd.f32 %v2145, 1.0
    %v2156 = vlog2.pop %v2155
    %v2157 = vmul.f32 %v2156, 0.6931472
    %v2158 = vmul.f32 -0.5, %v2145
    %v2159 = vadd.f32 %v2158, 1.0
    %v2160 = vmul.f32 %v2159, %v2145
    %v2161 = vand.u32 2147483647, %v2145
    %vm2162 = vcmp.lt.f32.partialorder %v2161, 0.0004427343
    %v2163 = vsel %vm2162, %v2160, %v2157
    %v2164 = vadd.f32 %v2148, 1.0
    %v2165 = vlog2.pop %v2164
    %v2166 = vmul.f32 %v2165, 0.6931472
    %v2167 = vmul.f32 -0.5, %v2148
    %v2168 = vadd.f32 %v2167, 1.0
    %v2169 = vmul.f32 %v2168, %v2148
    %v2170 = vand.u32 2147483647, %v2148
    %vm2171 = vcmp.lt.f32.partialorder %v2170, 0.0004427343
    %v2172 = vsel %vm2171, %v2169, %v2166
    %v2173 = vadd.f32 %v2151, 1.0
    %v2174 = vlog2.pop %v2173
    %v2175 = vmul.f32 %v2174, 0.6931472
    %v2176 = vmul.f32 -0.5, %v2151
    %v2177 = vadd.f32 %v2176, 1.0
    %v2178 = vmul.f32 %v2177, %v2151
    %v2179 = vand.u32 2147483647, %v2151
    %vm2180 = vcmp.lt.f32.partialorder %v2179, 0.0004427343
    %v2181 = vsel %vm2180, %v2178, %v2175
    %v2182 = vadd.f32 %v2154, 1.0
    %v2183 = vlog2.pop %v2182
    %v2184 = vmul.f32 %v2183, 0.6931472
    %v2185 = vmul.f32 -0.5, %v2154
    %v2186 = vadd.f32 %v2185, 1.0
    %v2187 = vmul.f32 %v2186, %v2154
    %v2188 = vand.u32 2147483647, %v2154
    %vm2189 = vcmp.lt.f32.partialorder %v2188, 0.0004427343
    %v2190 = vsel %vm2189, %v2187, %v2184
    %v2195 = vlaneseq
    %v2196 = vshrl.u32 %v2195, 7
    %v2197 = vsub.s32 %v585, %v2196
    %v2198 = vrot.slane %v2163, %v2197
    %v2199 = vlaneseq
    %v2200 = vshrl.u32 %v2199, 7
    %v2201 = vsub.s32 %v585, %v2200
    %v2202 = vrot.slane %v2172, %v2201
    %v2203 = vlaneseq
    %v2204 = vshrl.u32 %v2203, 7
    %v2205 = vsub.s32 %v585, %v2204
    %v2206 = vrot.slane %v2181, %v2205
    %v2207 = vlaneseq
    %v2208 = vshrl.u32 %v2207, 7
    %v2209 = vsub.s32 %v585, %v2208
    %v2210 = vrot.slane %v2190, %v2209
    %v2211 = vsel %vm602, %v2202, %v2198
    %v2212 = vsel %vm604, %v2206, %v2211
    %v2213 = vsel %vm606, %v2210, %v2212
    %v2215 = vsel %vm609, %v2213, 0.0
    %2216 = vadd.xlane.f32.xlu0 %v2215
    %v2217 = vpop.xlane.xlu0 %2216
    %v2218 = vsub.f32 %v231, 1.0
    %v2219 = vsub.f32 %v310, 1.0
    %v2220 = vsub.f32 %v389, 1.0
    %v2221 = vsub.f32 %v468, 1.0
    %v2222 = vmul.f32 %v2218, %v2218
    %v2223 = vmul.f32 %v2219, %v2219
    %v2224 = vmul.f32 %v2220, %v2220
    %v2225 = vmul.f32 %v2221, %v2221
    %v2226 = vmul.f32 %v2222, -500000.0
    %v2227 = vmul.f32 %v2223, -500000.0
    %v2228 = vmul.f32 %v2224, -500000.0
    %v2229 = vmul.f32 %v2225, -500000.0
    %v2230 = vmul.f32 %v2226, 1.442695
    %v2231 = vpow.pop %v2230
    %v2232 = vmul.f32 %v2227, 1.442695
    %v2233 = vpow.pop %v2232
    %v2234 = vmul.f32 %v2228, 1.442695
    %v2235 = vpow.pop %v2234
    %v2236 = vmul.f32 %v2229, 1.442695
    %v2237 = vpow.pop %v2236
    %v2238 = vsel %vm531, %v2231, 0.0
    %2239 = vadd.xlane.f32.xlu0 %v2238
    %v2240 = vpop.xlane.xlu0 %2239
    %v2241 = vsel %vm531, %v2233, 0.0
    %2242 = vadd.xlane.f32.xlu0 %v2241
    %v2243 = vpop.xlane.xlu0 %2242
    %v2244 = vsel %vm531, %v2235, 0.0
    %2245 = vadd.xlane.f32.xlu0 %v2244
    %v2246 = vpop.xlane.xlu0 %2245
    %v2247 = vsel %vm531, %v2237, 0.0
    %2248 = vadd.xlane.f32.xlu0 %v2247
    %v2249 = vpop.xlane.xlu0 %2248
    %v2250 = vadd.f32 %v2240, 1.0
    %v2251 = vlog2.pop %v2250
    %v2252 = vmul.f32 %v2251, 0.6931472
    %v2253 = vmul.f32 -0.5, %v2240
    %v2254 = vadd.f32 %v2253, 1.0
    %v2255 = vmul.f32 %v2254, %v2240
    %v2256 = vand.u32 2147483647, %v2240
    %vm2257 = vcmp.lt.f32.partialorder %v2256, 0.0004427343
    %v2258 = vsel %vm2257, %v2255, %v2252
    %v2259 = vadd.f32 %v2243, 1.0
    %v2260 = vlog2.pop %v2259
    %v2261 = vmul.f32 %v2260, 0.6931472
    %v2262 = vmul.f32 -0.5, %v2243
    %v2263 = vadd.f32 %v2262, 1.0
    %v2264 = vmul.f32 %v2263, %v2243
    %v2265 = vand.u32 2147483647, %v2243
    %vm2266 = vcmp.lt.f32.partialorder %v2265, 0.0004427343
    %v2267 = vsel %vm2266, %v2264, %v2261
    %v2268 = vadd.f32 %v2246, 1.0
    %v2269 = vlog2.pop %v2268
    %v2270 = vmul.f32 %v2269, 0.6931472
    %v2271 = vmul.f32 -0.5, %v2246
    %v2272 = vadd.f32 %v2271, 1.0
    %v2273 = vmul.f32 %v2272, %v2246
    %v2274 = vand.u32 2147483647, %v2246
    %vm2275 = vcmp.lt.f32.partialorder %v2274, 0.0004427343
    %v2276 = vsel %vm2275, %v2273, %v2270
    %v2277 = vadd.f32 %v2249, 1.0
    %v2278 = vlog2.pop %v2277
    %v2279 = vmul.f32 %v2278, 0.6931472
    %v2280 = vmul.f32 -0.5, %v2249
    %v2281 = vadd.f32 %v2280, 1.0
    %v2282 = vmul.f32 %v2281, %v2249
    %v2283 = vand.u32 2147483647, %v2249
    %vm2284 = vcmp.lt.f32.partialorder %v2283, 0.0004427343
    %v2285 = vsel %vm2284, %v2282, %v2279
    %v2290 = vlaneseq
    %v2291 = vshrl.u32 %v2290, 7
    %v2292 = vsub.s32 %v585, %v2291
    %v2293 = vrot.slane %v2258, %v2292
    %v2294 = vlaneseq
    %v2295 = vshrl.u32 %v2294, 7
    %v2296 = vsub.s32 %v585, %v2295
    %v2297 = vrot.slane %v2267, %v2296
    %v2298 = vlaneseq
    %v2299 = vshrl.u32 %v2298, 7
    %v2300 = vsub.s32 %v585, %v2299
    %v2301 = vrot.slane %v2276, %v2300
    %v2302 = vlaneseq
    %v2303 = vshrl.u32 %v2302, 7
    %v2304 = vsub.s32 %v585, %v2303
    %v2305 = vrot.slane %v2285, %v2304
    %v2306 = vsel %vm602, %v2297, %v2293
    %v2307 = vsel %vm604, %v2301, %v2306
    %v2308 = vsel %vm606, %v2305, %v2307
    %v2310 = vsel %vm609, %v2308, 0.0
    %2311 = vadd.xlane.f32.xlu0 %v2310
    %v2312 = vpop.xlane.xlu0 %2311
    %vm2313 = vcmask 7168
    %v2314 = vsel %vm2313, %v612, %v695
    %vm2315 = vcmask 15360
    %v2316 = vsel %vm2315, %v2314, %v770
    %vm2317 = vcmask 23552
    %v2318 = vsel %vm2317, %v2316, %v853
    %vm2319 = vcmask 31744
    %v2320 = vsel %vm2319, %v2318, %v936
    %vm2321 = vcmask 39936
    %v2322 = vsel %vm2321, %v2320, %v1039
    %vm2323 = vcmask 48128
    %v2324 = vsel %vm2323, %v2322, %v1122
    %vm2325 = vcmask 56320
    %v2326 = vsel %vm2325, %v2324, %v1197
    %vm2327 = vcmask 64512
    %v2328 = vsel %vm2327, %v2326, %v1280
    %vm2329 = vcmask 72704
    %v2330 = vsel %vm2329, %v2328, %v1363
    %vm2331 = vcmask 80896
    %v2332 = vsel %vm2331, %v2330, %v1466
    %vm2333 = vcmask 89088
    %v2334 = vsel %vm2333, %v2332, %v1549
    %vm2335 = vcmask 97280
    %v2336 = vsel %vm2335, %v2334, %v1624
    %vm2337 = vcmask 105472
    %v2338 = vsel %vm2337, %v2336, %v1707
    %vm2339 = vcmask 113664
    %v2340 = vsel %vm2339, %v2338, %v1790
    %vm2341 = vcmask 121856
    %v2342 = vsel %vm2341, %v2340, %v1893
    %v2343 = vsel %vm2313, %v1976, %v2051
    %v2344 = vsel %vm2315, %v2343, %v2134
    %v2345 = vsel %vm2317, %v2344, %v2217
    %v2346 = vsel %vm2319, %v2345, %v2312
    %2348 = vrot.lane.b32.xlu0 %v2346, 16
    %v2349 = vpop.permute.xlu0 %2348
    %v2351 = vsel %vm531, %v2342, %v2349
    %v2352 = vmax.f32 %v2351, 0.0
    %v2353 = vld [vmem:[%s2] sm:$0xff]
    %v2354 = vld [vmem:[%s2 + $0x8] sm:$0xff]
    %v2355 = vld [vmem:[%s2 + $0x10] sm:$0x1f]
    %v2356 = vld [vmem:[#allocation6] sm:$0x1]
    %v2358 = vlaneseq
    %v2359 = vshrl.u32 %v2358, 7
    %v2360 = vsub.s32 0, %v2359
    %v2361 = vrot.slane %v2356, %v2360
    %vm2363 = vcmask 171008
    %v2365 = vsel %vm2363, %v2352, 0
    %vm2367 = vcmask 1044480
    %v2369 = vsel %vm2367, %v2355, 0
    %2371 = vmatprep.subr.mxu0 0.0
    %2372 = vmatpush1.msra.mxu0 %v2353
    %2373 = vmatprep.subr.mxu0 0.0
    %2374 = vmatpush1.msra.mxu0 %v2354
    %2375 = vmatprep.subr.mxu0 0.0
    %2376 = vmatpush1.msra.mxu0 %v2369
    %2377 = vmatprep.subr.mxu0 0.0
    %2378 = vmatpush1.msra.mxu0 0.0
    %2379 = vmatprep.subr.mxu0 0.0
    %2380 = vmatpush1.msra.mxu0 0.0
    %2381 = vmatprep.subr.mxu0 0.0
    %2382 = vmatpush1.msra.mxu0 0.0
    %2383 = vmatprep.subr.mxu0 0.0
    %2384 = vmatpush1.msra.mxu0 0.0
    %2385 = vmatprep.subr.mxu0 0.0
    %2386 = vmatpush1.msra.mxu0 0.0
    %2387 = vmatprep.subr.mxu0 0.0
    %2388 = vmatpush1.msra.mxu0 0.0
    %2389 = vmatprep.subr.mxu0 0.0
    %2390 = vmatpush1.msra.mxu0 0.0
    %2391 = vmatprep.subr.mxu0 0.0
    %2392 = vmatpush1.msra.mxu0 0.0
    %2393 = vmatprep.subr.mxu0 0.0
    %2394 = vmatpush1.msra.mxu0 0.0
    %2395 = vmatprep.subr.mxu0 0.0
    %2396 = vmatpush1.msra.mxu0 0.0
    %2397 = vmatprep.subr.mxu0 0.0
    %2398 = vmatpush1.msra.mxu0 0.0
    %2399 = vmatprep.subr.mxu0 0.0
    %2400 = vmatpush1.msra.mxu0 0.0
    %2401 = vmatprep.subr.mxu0 0.0
    %2402 = vmatpush1.msra.mxu0 0.0
    %2403 = vmatprep.subr.mxu0 0.0
    %2404 = vmatpush1.msra.mxu0 0.0
    %2405 = vmatprep.subr.mxu0 0.0
    %2406 = vmatpush1.msra.mxu0 0.0
    %2407 = vmatprep.subr.mxu0 0.0
    %2408 = vmatpush1.msra.mxu0 0.0
    %2409 = vmatprep.subr.mxu0 0.0
    %2410 = vmatpush1.msra.mxu0 0.0
    %2411 = vmatprep.subr.mxu0 0.0
    %2412 = vmatpush1.msra.mxu0 0.0
    %2413 = vmatprep.subr.mxu0 0.0
    %2414 = vmatpush1.msra.mxu0 0.0
    %2415 = vmatprep.subr.mxu0 0.0
    %2416 = vmatpush1.msra.mxu0 0.0
    %2417 = vmatprep.subr.mxu0 0.0
    %2418 = vmatpush1.msra.mxu0 0.0
    %2419 = vmatprep.subr.mxu0 0.0
    %2420 = vmatpush1.msra.mxu0 0.0
    %2421 = vmatprep.subr.mxu0 0.0
    %2422 = vmatpush1.msra.mxu0 0.0
    %2423 = vmatprep.subr.mxu0 0.0
    %2424 = vmatpush1.msra.mxu0 0.0
    %2425 = vmatprep.subr.mxu0 0.0
    %2426 = vmatpush1.msra.mxu0 0.0
    %2427 = vmatprep.subr.mxu0 0.0
    %2428 = vmatpush1.msra.mxu0 0.0
    %2429 = vmatprep.subr.mxu0 0.0
    %2430 = vmatpush1.msra.mxu0 0.0
    %2431 = vmatprep.subr.mxu0 0.0
    %2432 = vmatpush1.msra.mxu0 0.0
    %2433 = vmatprep.subr.mxu0 0.0
    %2434 = vmatpush1.msra.mxu0 0.0
    %2435 = vmatprep.mubr.f32.mxu0 0.0
    %2436 = vmatmul.mubr.f32.gmra.mrb[0].mxu0 %v2365
    %v2437 = vpop.f32.mrb[0].mxu0
    %v2438 = vadd.f32 %v2361, %v2437
    %v2439 = vpop.f32.mrb[0].mxu0
    %2440 = vdwg.mxu0
    %v2441 = vmax.f32 %v2438, 0.0
    %v2442 = vld [vmem:[%s4] sm:$0xff]
    %v2443 = vld [vmem:[%s4 + $0x8] sm:$0x3]
    %v2444 = vld [vmem:[%s5] sm:$0x1]
    %v2446 = vlaneseq
    %v2447 = vshrl.u32 %v2446, 7
    %v2448 = vsub.s32 0, %v2447
    %v2449 = vrot.slane %v2444, %v2448
    %v2452 = vsel %vm2331, %v2441, 0
    %vm2454 = vcmask 1041408
    %v2456 = vsel %vm2454, %v2443, 0
    %2458 = vmatprep.subr.mxu0 0.0
    %2459 = vmatpush1.msra.mxu0 %v2442
    %2460 = vmatprep.subr.mxu0 0.0
    %2461 = vmatpush1.msra.mxu0 %v2456
    %2462 = vmatprep.subr.mxu0 0.0
    %2463 = vmatpush1.msra.mxu0 0.0
    %2464 = vmatprep.subr.mxu0 0.0
    %2465 = vmatpush1.msra.mxu0 0.0
    %2466 = vmatprep.subr.mxu0 0.0
    %2467 = vmatpush1.msra.mxu0 0.0
    %2468 = vmatprep.subr.mxu0 0.0
    %2469 = vmatpush1.msra.mxu0 0.0
    %2470 = vmatprep.subr.mxu0 0.0
    %2471 = vmatpush1.msra.mxu0 0.0
    %2472 = vmatprep.subr.mxu0 0.0
    %2473 = vmatpush1.msra.mxu0 0.0
    %2474 = vmatprep.subr.mxu0 0.0
    %2475 = vmatpush1.msra.mxu0 0.0
    %2476 = vmatprep.subr.mxu0 0.0
    %2477 = vmatpush1.msra.mxu0 0.0
    %2478 = vmatprep.subr.mxu0 0.0
    %2479 = vmatpush1.msra.mxu0 0.0
    %2480 = vmatprep.subr.mxu0 0.0
    %2481 = vmatpush1.msra.mxu0 0.0
    %2482 = vmatprep.subr.mxu0 0.0
    %2483 = vmatpush1.msra.mxu0 0.0
    %2484 = vmatprep.subr.mxu0 0.0
    %2485 = vmatpush1.msra.mxu0 0.0
    %2486 = vmatprep.subr.mxu0 0.0
    %2487 = vmatpush1.msra.mxu0 0.0
    %2488 = vmatprep.subr.mxu0 0.0
    %2489 = vmatpush1.msra.mxu0 0.0
    %2490 = vmatprep.subr.mxu0 0.0
    %2491 = vmatpush1.msra.mxu0 0.0
    %2492 = vmatprep.subr.mxu0 0.0
    %2493 = vmatpush1.msra.mxu0 0.0
    %2494 = vmatprep.subr.mxu0 0.0
    %2495 = vmatpush1.msra.mxu0 0.0
    %2496 = vmatprep.subr.mxu0 0.0
    %2497 = vmatpush1.msra.mxu0 0.0
    %2498 = vmatprep.subr.mxu0 0.0
    %2499 = vmatpush1.msra.mxu0 0.0
    %2500 = vmatprep.subr.mxu0 0.0
    %2501 = vmatpush1.msra.mxu0 0.0
    %2502 = vmatprep.subr.mxu0 0.0
    %2503 = vmatpush1.msra.mxu0 0.0
    %2504 = vmatprep.subr.mxu0 0.0
    %2505 = vmatpush1.msra.mxu0 0.0
    %2506 = vmatprep.subr.mxu0 0.0
    %2507 = vmatpush1.msra.mxu0 0.0
    %2508 = vmatprep.subr.mxu0 0.0
    %2509 = vmatpush1.msra.mxu0 0.0
    %2510 = vmatprep.subr.mxu0 0.0
    %2511 = vmatpush1.msra.mxu0 0.0
    %2512 = vmatprep.subr.mxu0 0.0
    %2513 = vmatpush1.msra.mxu0 0.0
    %2514 = vmatprep.subr.mxu0 0.0
    %2515 = vmatpush1.msra.mxu0 0.0
    %2516 = vmatprep.subr.mxu0 0.0
    %2517 = vmatpush1.msra.mxu0 0.0
    %2518 = vmatprep.subr.mxu0 0.0
    %2519 = vmatpush1.msra.mxu0 0.0
    %2520 = vmatprep.subr.mxu0 0.0
    %2521 = vmatpush1.msra.mxu0 0.0
    %2522 = vmatprep.mubr.f32.mxu0 0.0
    %2523 = vmatmul.mubr.f32.gmra.mrb[0].mxu0 %v2452
    %v2524 = vpop.f32.mrb[0].mxu0
    %v2525 = vadd.f32 %v2449, %v2524
    %v2526 = vpop.f32.mrb[0].mxu0
    %2527 = vdwg.mxu0
    %v2528 = vmax.f32 %v2525, 0.0
    %v2529 = vld [vmem:[%s6] sm:$0x1f]
    %v2530 = vld [vmem:[#allocation2] sm:$0x1]
    %v2532 = vlaneseq
    %v2533 = vshrl.u32 %v2532, 7
    %v2534 = vsub.s32 0, %v2533
    %v2535 = vrot.slane %v2530, %v2534
    %v2538 = vsel %vm2321, %v2528, 0
    %v2541 = vsel %vm2367, %v2529, 0
    %2543 = vmatprep.subr.mxu0 0.0
    %2544 = vmatpush1.msra.mxu0 %v2541
    %2545 = vmatprep.subr.mxu0 0.0
    %2546 = vmatpush1.msra.mxu0 0.0
    %2547 = vmatprep.subr.mxu0 0.0
    %2548 = vmatpush1.msra.mxu0 0.0
    %2549 = vmatprep.subr.mxu0 0.0
    %2550 = vmatpush1.msra.mxu0 0.0
    %2551 = vmatprep.subr.mxu0 0.0
    %2552 = vmatpush1.msra.mxu0 0.0
    %2553 = vmatprep.subr.mxu0 0.0
    %2554 = vmatpush1.msra.mxu0 0.0
    %2555 = vmatprep.subr.mxu0 0.0
    %2556 = vmatpush1.msra.mxu0 0.0
    %2557 = vmatprep.subr.mxu0 0.0
    %2558 = vmatpush1.msra.mxu0 0.0
    %2559 = vmatprep.subr.mxu0 0.0
    %2560 = vmatpush1.msra.mxu0 0.0
    %2561 = vmatprep.subr.mxu0 0.0
    %2562 = vmatpush1.msra.mxu0 0.0
    %2563 = vmatprep.subr.mxu0 0.0
    %2564 = vmatpush1.msra.mxu0 0.0
    %2565 = vmatprep.subr.mxu0 0.0
    %2566 = vmatpush1.msra.mxu0 0.0
    %2567 = vmatprep.subr.mxu0 0.0
    %2568 = vmatpush1.msra.mxu0 0.0
    %2569 = vmatprep.subr.mxu0 0.0
    %2570 = vmatpush1.msra.mxu0 0.0
    %2571 = vmatprep.subr.mxu0 0.0
    %2572 = vmatpush1.msra.mxu0 0.0
    %2573 = vmatprep.subr.mxu0 0.0
    %2574 = vmatpush1.msra.mxu0 0.0
    %2575 = vmatprep.subr.mxu0 0.0
    %2576 = vmatpush1.msra.mxu0 0.0
    %2577 = vmatprep.subr.mxu0 0.0
    %2578 = vmatpush1.msra.mxu0 0.0
    %2579 = vmatprep.subr.mxu0 0.0
    %2580 = vmatpush1.msra.mxu0 0.0
    %2581 = vmatprep.subr.mxu0 0.0
    %2582 = vmatpush1.msra.mxu0 0.0
    %2583 = vmatprep.subr.mxu0 0.0
    %2584 = vmatpush1.msra.mxu0 0.0
    %2585 = vmatprep.subr.mxu0 0.0
    %2586 = vmatpush1.msra.mxu0 0.0
    %2587 = vmatprep.subr.mxu0 0.0
    %2588 = vmatpush1.msra.mxu0 0.0
    %2589 = vmatprep.subr.mxu0 0.0
    %2590 = vmatpush1.msra.mxu0 0.0
    %2591 = vmatprep.subr.mxu0 0.0
    %2592 = vmatpush1.msra.mxu0 0.0
    %2593 = vmatprep.subr.mxu0 0.0
    %2594 = vmatpush1.msra.mxu0 0.0
    %2595 = vmatprep.subr.mxu0 0.0
    %2596 = vmatpush1.msra.mxu0 0.0
    %2597 = vmatprep.subr.mxu0 0.0
    %2598 = vmatpush1.msra.mxu0 0.0
    %2599 = vmatprep.subr.mxu0 0.0
    %2600 = vmatpush1.msra.mxu0 0.0
    %2601 = vmatprep.subr.mxu0 0.0
    %2602 = vmatpush1.msra.mxu0 0.0
    %2603 = vmatprep.subr.mxu0 0.0
    %2604 = vmatpush1.msra.mxu0 0.0
    %2605 = vmatprep.subr.mxu0 0.0
    %2606 = vmatpush1.msra.mxu0 0.0
    %2607 = vmatprep.mubr.f32.mxu0 0.0
    %2608 = vmatmul.mubr.f32.gmra.mrb[0].mxu0 %v2538
    %v2609 = vpop.f32.mrb[0].mxu0
    %v2610 = vadd.f32 %v2535, %v2609
    %v2611 = vpop.f32.mrb[0].mxu0
    %2612 = vdwg.mxu0
    %2614 = vset.pattern.permute.xlu0 0
    %2615 = vperm.xlu0 %2614, %v2610
    %v2616 = vpop.permute.xlu0 %2615
    %2618 = vst [vmem:[#allocation8] sm:$0xf] %v2616
    // Predicated region
    $region42: #{tpu_custom_call.1} parent=1 // pred_check
      _
    $region43: #{tpu_custom_call.1} parent=1 // pred_check_branch
      %2620 = sbr.rel (0) target = $region45
    $region44: #{tpu_custom_call.1} parent=1 // pred_region
      %s2622 = ssub.s32 64, 64
      %2623 = vsyncadd [#allocation5], %s2622
      %s2625 = sshll.u32 [#allocation8], 4
      %s2626 = int_to_ptr.vmem [resolvable:$true] %s2625
      %2628 = dma.vmem_to_hbm [thread:$0]  %s2626, 64, %s8, [#allocation5]
    $region45: #{tpu_custom_call.1} parent=1 // pred_fallthru
      _
    // Predicated region
    $region46: #{tpu_custom_call.1} parent=1 // pred_check
      _
    $region47: #{tpu_custom_call.1} parent=1 // pred_check_branch
      %2630 = sbr.rel (0) target = $region49
    $region48: #{tpu_custom_call.1} parent=1 // pred_region
      %2631 = dma.done [#allocation5], 64
    $region49: #{tpu_custom_call.1} parent=1 // pred_fallthru
      _
    %2632 = vsyncpa [#allocation4], 1
    %2633 = vsyncpa [#allocation7], 1
    %2634 = vsyncpa [#allocation5], 1

</llo_original>
